<compile_context>
chip_gen: v5e
topology: v5e:2x2
jax: 0.10.0
libtpu: 0.0.40
codegen_flags: <defaults>
</compile_context>

<pallas_src>
import functools

import jax
import jax.numpy as jnp
import numpy as np
from jax import lax
from jax.experimental import pallas as pl
from jax.experimental.pallas import tpu as pltpu


# --------------------------------------------------------------------------
# Fused ResUnit kernel: conv1x1 -> conv3x3(pad=1) -> conv1x1 [-> maxpool2x2]
# on a lane-packed (rows, W*C) layout.
# --------------------------------------------------------------------------
def _res_unit_kernel(x_ref, w1_ref, b1_ref, w2_ref, b2_ref, w3_ref, b3_ref,
                     o_ref, y_scr, *pool_scr, TH, H, pool):
    """One row tile of a fused ResUnit (packed layout).

    x_ref : (1, H+2, W*Cin)        row-padded, lane-packed input
    w1_ref: (W*Cin, W*Cmid)        kron(I_W, w1)
    b1_ref: (1, W*Cmid)
    w2_ref: (3, W*Cmid, W*Cmid)    banded matrices, one per 3x3 kernel row
    b2_ref: (1, W*Cmid)
    w3_ref: (n3, W*Cmid, Lout)     n3 = 2 (even/odd column selection) if pool
    b3_ref: (1, Lout)
    o_ref : (1, TH_out, Lout)      lane-dense packed output tile
    y_scr : VMEM (TH+2, W*Cmid)    post-1x1 activation incl. row halo
    pool_scr (pool only): VMEM (TH, Lout)  column-pooled rows
    """
    r = pl.program_id(1)
    row0 = pl.multiple_of(r * TH, TH)          # first padded row of this tile

    # ---- 1x1 conv over the tile rows + halo rows: ONE matmul ----------------
    xt = x_ref[0, pl.ds(row0, TH + 2), :]                       # (TH+2, W*Cin)
    y = jnp.dot(xt, w1_ref[...],
                preferred_element_type=jnp.float32) + b1_ref[...]
    # rows outside [1, H] are the 3x3 conv's zero padding -> clear the bias
    gr = lax.broadcasted_iota(jnp.int32, (TH + 2, 1), 0) + row0
    keep = jnp.logical_and(gr >= 1, gr <= H)
    y_scr[...] = jnp.where(keep, y, 0.0)

    # ---- 3x3 conv: three banded matmuls (column shifts folded into weights) -
    z = b2_ref[...]
    z = z + jnp.dot(y_scr[pl.ds(0, TH), :], w2_ref[0],
                    preferred_element_type=jnp.float32)
    z = z + jnp.dot(y_scr[pl.ds(1, TH), :], w2_ref[1],
                    preferred_element_type=jnp.float32)
    z = z + jnp.dot(y_scr[pl.ds(2, TH), :], w2_ref[2],
                    preferred_element_type=jnp.float32)         # (TH, W*Cmid)

    # ---- final 1x1 conv (+ fused 2x2 max-pool) -------------------------------
    if not pool:
        out = jnp.dot(z, w3_ref[0],
                      preferred_element_type=jnp.float32) + b3_ref[...]
    else:
        zc_scr, = pool_scr
        # even / odd column selections are pre-folded into the two w3 copies
        ze = jnp.dot(z, w3_ref[0], preferred_element_type=jnp.float32)
        zo = jnp.dot(z, w3_ref[1], preferred_element_type=jnp.float32)
        zc_scr[...] = jnp.maximum(ze, zo) + b3_ref[...]         # (TH, Lout)
        # row half of the pool: max over even/odd row pairs (stride-2 ref read)
        out = jnp.maximum(zc_scr[pl.ds(0, TH // 2, 2), :],
                          zc_scr[pl.ds(1, TH // 2, 2), :])
    o_ref[0] = out.astype(o_ref.dtype)


# --------------------------------------------------------------------------
# Wrapper
# --------------------------------------------------------------------------
def _kron(a, b):
    """kron(a, b)[(i*m + u), (j*n + v)] = a[i, j] * b[u, v]."""
    p, q = a.shape
    m, n = b.shape
    return jnp.einsum("pq,mn->pmqn", a, b).reshape(p * m, q * n)


def res_unit(x_nhwc, w1, b1, w2, b2, w3, b3, *, pool):
    """Fused ResUnit (optionally followed by a 2x2 max-pool) on NHWC input."""
    N, H, W, Cin = x_nhwc.shape
    Cmid = w1.shape[-1]
    Cout = w3.shape[-1]
    if pool:
        assert H % 2 == 0 and W % 2 == 0, "fused pool path requires even H, W"

    # Grid collapse: whole (small) image per grid step.  The batch axis stays
    # "parallel" so a 2-TC chip (v7x) still shards the work.
    # TODO(synk): halo-row tiling (TH < H) + manual DMA for large images.
    TH = H
    R = H // TH

    # ---- pack (W, C) onto the lane axis; pad rows for the 3x3 halo ----------
    xp = jnp.pad(x_nhwc, ((0, 0), (1, 1), (0, 0), (0, 0)))
    xpk = xp.reshape(N, H + 2, W * Cin)

    eye_w = np.eye(W, dtype=np.float32)
    w1k = _kron(eye_w, w1)                                     # (W*Cin, W*Cmid)
    b1p = jnp.tile(b1.reshape(1, Cmid), (1, W))
    # One banded matrix per 3x3 kernel row: the dx shifts and the zero column
    # padding are folded into the weights, so the kernel does 3 plain matmuls.
    w2b = jnp.stack([
        sum(_kron(np.eye(W, k=1 - dx, dtype=np.float32), w2[dy, dx])
            for dx in range(3))
        for dy in range(3)])                                   # (3, W*Cmid, W*Cmid)
    b2p = jnp.tile(b2.reshape(1, Cmid), (1, W))

    if pool:
        H_out, W_out, TH_out = H // 2, W // 2, TH // 2
        sel = np.zeros((2, W, W_out), np.float32)
        sel[0, 2 * np.arange(W_out), np.arange(W_out)] = 1.0        # even cols
        sel[1, 2 * np.arange(W_out) + 1, np.arange(W_out)] = 1.0    # odd cols
        w3s = jnp.stack([_kron(sel[0], w3), _kron(sel[1], w3)])
    else:
        H_out, W_out, TH_out = H, W, TH
        w3s = _kron(eye_w, w3)[None]
    Lout = W_out * Cout
    b3p = jnp.tile(b3.reshape(1, Cout), (1, W_out))
    n3 = w3s.shape[0]

    kernel = functools.partial(_res_unit_kernel, TH=TH, H=H, pool=pool)

    scratch = [pltpu.VMEM((TH + 2, W * Cmid), jnp.float32)]
    if pool:
        scratch.append(pltpu.VMEM((TH, Lout), jnp.float32))

    # VMEM budget derived from the actual per-tile buffers (x2 for pipeline
    # double-buffering) plus headroom for compiler temporaries.
    block_elems = ((H + 2) * W * Cin + TH_out * Lout
                   + w1k.size + b1p.size + w2b.size + b2p.size
                   + w3s.size + b3p.size)
    scratch_elems = (TH + 2) * W * Cmid + (TH * Lout if pool else 0)
    vmem_limit = min(int(4 * (2 * block_elems + scratch_elems) * 2) + (8 << 20),
                     100 << 20)

    flops = 2 * N * ((H + 2) * (W * Cin) * (W * Cmid)
                     + 3 * H * (W * Cmid) ** 2
                     + n3 * H * (W * Cmid) * Lout)
    bytes_accessed = 4 * (xpk.size + N * H_out * Lout + w1k.size + b1p.size
                          + w2b.size + b2p.size + w3s.size + b3p.size)

    out_packed = pl.pallas_call(
        kernel,
        out_shape=jax.ShapeDtypeStruct((N, H_out, Lout), x_nhwc.dtype),
        grid_spec=pltpu.PrefetchScalarGridSpec(
            num_scalar_prefetch=0,
            grid=(N, R),
            in_specs=[
                pl.BlockSpec((1, H + 2, W * Cin), lambda n, r: (n, 0, 0)),
                pl.BlockSpec((W * Cin, W * Cmid), lambda n, r: (0, 0)),
                pl.BlockSpec((1, W * Cmid), lambda n, r: (0, 0)),
                pl.BlockSpec((3, W * Cmid, W * Cmid), lambda n, r: (0, 0, 0)),
                pl.BlockSpec((1, W * Cmid), lambda n, r: (0, 0)),
                pl.BlockSpec((n3, W * Cmid, Lout), lambda n, r: (0, 0, 0)),
                pl.BlockSpec((1, Lout), lambda n, r: (0, 0)),
            ],
            out_specs=pl.BlockSpec((1, TH_out, Lout), lambda n, r: (n, r, 0)),
            scratch_shapes=scratch,
        ),
        compiler_params=pltpu.CompilerParams(
            dimension_semantics=("parallel", "parallel"),
            vmem_limit_bytes=vmem_limit,
        ),
        cost_estimate=pl.CostEstimate(
            flops=int(flops), transcendentals=0,
            bytes_accessed=int(bytes_accessed)),
    )(xpk, w1k, b1p, w2b, b2p, w3s, b3p)

    # unpack the lane-dense output back to NHWC (free XLA reshape)
    return out_packed.reshape(N, H_out, W_out, Cout)


# --------------------------------------------------------------------------
# Parameter init (deterministic, synthetic)
# --------------------------------------------------------------------------
def _init_conv(key, cin, cout, ksize):
    kw, kb = jax.random.split(key)
    if ksize == 1:
        w = 0.1 * jax.random.normal(kw, (cin, cout), jnp.float32)
    else:
        w = 0.1 * jax.random.normal(kw, (ksize, ksize, cin, cout), jnp.float32)
    b = 0.1 * jax.random.normal(kb, (cout,), jnp.float32)
    return w, b


def init_feature_branch_params(key, ioch):
    keys = jax.random.split(key, 6)
    # ResUnitUp(ioch, ioch*4): 1x1(ioch->ioch), 3x3(ioch->ioch), 1x1(ioch->4*ioch)
    up1 = _init_conv(keys[0], ioch, ioch, 1)
    up2 = _init_conv(keys[1], ioch, ioch, 3)
    up3 = _init_conv(keys[2], ioch, ioch * 4, 1)
    # ResUnitDown(4*ioch, ioch): 1x1(4i->4i), 3x3(4i->4i), 1x1(4i->i)
    dn1 = _init_conv(keys[3], ioch * 4, ioch * 4, 1)
    dn2 = _init_conv(keys[4], ioch * 4, ioch * 4, 3)
    dn3 = _init_conv(keys[5], ioch * 4, ioch, 1)
    return dict(up1=up1, up2=up2, up3=up3, dn1=dn1, dn2=dn2, dn3=dn3)


# --------------------------------------------------------------------------
# FeatureBranch forward
# --------------------------------------------------------------------------
def feature_branch_forward(x_nchw, params):
    x = jnp.transpose(x_nchw, (0, 2, 3, 1))  # NCHW -> NHWC

    # ResUnitUp + fused 2x2 max-pool (x1 never hits HBM)
    p = res_unit(x, *params["up1"], *params["up2"], *params["up3"], pool=True)

    # ResUnitDown
    x2 = res_unit(p, *params["dn1"], *params["dn2"], *params["dn3"], pool=False)

    return jnp.transpose(x2, (0, 3, 1, 2))  # NHWC -> NCHW


# --------------------------------------------------------------------------
# Pure-JAX reference (for correctness check)
# --------------------------------------------------------------------------
def _ref_conv(x_nhwc, w, b, ksize):
    if ksize == 1:
        w4 = w.reshape(1, 1, *w.shape)
        pad = "VALID"
    else:
        w4 = w
        pad = "SAME"
    out = lax.conv_general_dilated(
        x_nhwc, w4, window_strides=(1, 1), padding=pad,
        dimension_numbers=("NHWC", "HWIO", "NHWC"),
    )
    return out + b


def _ref_forward(x_nchw, params):
    x = jnp.transpose(x_nchw, (0, 2, 3, 1))
    h = _ref_conv(x, *params["up1"], 1)
    h = _ref_conv(h, *params["up2"], 3)
    x1 = _ref_conv(h, *params["up3"], 1)
    p = lax.reduce_window(
        x1, -jnp.inf, lax.max, (1, 2, 2, 1), (1, 2, 2, 1), "VALID"
    )
    h = _ref_conv(p, *params["dn1"], 1)
    h = _ref_conv(h, *params["dn2"], 3)
    x2 = _ref_conv(h, *params["dn3"], 1)
    return jnp.transpose(x2, (0, 3, 1, 2))


# --------------------------------------------------------------------------
if __name__ == "__main__":
    key = jax.random.PRNGKey(0)
    kx, kp = jax.random.split(key)

    ioch = 4
    N, H, W = 2, 16, 16
    x = jax.random.normal(kx, (N, ioch, H, W), jnp.float32)  # NCHW input

    params = init_feature_branch_params(kp, ioch)

    out = jax.jit(feature_branch_forward)(x, params)
    out = jax.block_until_ready(out)
    assert out.shape == (N, ioch, H // 2, W // 2), out.shape

    ref = jax.block_until_ready(_ref_forward(x, params))
    np.testing.assert_allclose(np.asarray(out), np.asarray(ref),
                               rtol=1e-4, atol=1e-4)

    print("KERNEL_OK")
</pallas_src>

<mosaic_0001>
module attributes {stable_mosaic.version = 11 : i64} {
  func.func @_res_unit_kernel(%arg0: i32, %arg1: i32, %arg2: memref<1x18x64xf32, #tpu.memory_space<vmem>>, %arg3: memref<64x64xf32, #tpu.memory_space<vmem>>, %arg4: memref<1x64xf32, #tpu.memory_space<vmem>>, %arg5: memref<3x64x64xf32, #tpu.memory_space<vmem>>, %arg6: memref<1x64xf32, #tpu.memory_space<vmem>>, %arg7: memref<2x64x128xf32, #tpu.memory_space<vmem>>, %arg8: memref<1x128xf32, #tpu.memory_space<vmem>>, %arg9: memref<1x8x128xf32, #tpu.memory_space<vmem>>, %arg10: memref<18x64xf32, #tpu.memory_space<vmem>>, %arg11: memref<16x128xf32, #tpu.memory_space<vmem>>) attributes {dimension_semantics = [#tpu.dimension_semantics<parallel>, #tpu.dimension_semantics<parallel>], iteration_bounds = array<i64: 2, 1>, scalar_prefetch = 0 : i64, scratch_operands = 2 : i64, tpu.core_type = #tpu.core_type<tc>, window_params = [{transform_indices = @transform_0, window_bounds = array<i64: 1, 18, 64>}, {pipeline_mode = #tpu.pipeline_mode<synchronous>, transform_indices = @transform_1, window_bounds = array<i64: 64, 64>}, {pipeline_mode = #tpu.pipeline_mode<synchronous>, transform_indices = @transform_2, window_bounds = array<i64: 1, 64>}, {pipeline_mode = #tpu.pipeline_mode<synchronous>, transform_indices = @transform_3, window_bounds = array<i64: 3, 64, 64>}, {pipeline_mode = #tpu.pipeline_mode<synchronous>, transform_indices = @transform_4, window_bounds = array<i64: 1, 64>}, {pipeline_mode = #tpu.pipeline_mode<synchronous>, transform_indices = @transform_5, window_bounds = array<i64: 2, 64, 128>}, {pipeline_mode = #tpu.pipeline_mode<synchronous>, transform_indices = @transform_6, window_bounds = array<i64: 1, 128>}, {transform_indices = @transform_7, window_bounds = array<i64: 1, 8, 128>}]} {
    %c16_i32 = arith.constant 16 : i32
    %0 = arith.muli %arg1, %c16_i32 : i32
    %1 = tpu.assume_multiple %0, 16 : i32
    %c0 = arith.constant 0 : index
    %2 = arith.index_cast %1 : i32 to index
    %c0_0 = arith.constant 0 : index
    %3 = vector.load %arg2[%c0, %2, %c0_0] : memref<1x18x64xf32, #tpu.memory_space<vmem>>, vector<1x18x64xf32>
    %4 = vector.shape_cast %3 : vector<1x18x64xf32> to vector<18x64xf32>
    %c0_1 = arith.constant 0 : index
    %c0_2 = arith.constant 0 : index
    %5 = vector.load %arg3[%c0_1, %c0_2] : memref<64x64xf32, #tpu.memory_space<vmem>>, vector<64x64xf32>
    %cst = arith.constant dense<0.000000e+00> : vector<18x64xf32>
    %6 = tpu.matmul %4, %5, %cst {dimension_numbers = #tpu.dot_dimension_numbers<[1], [0], [0], [1], [0, 0, 1, 1], [], []>} : vector<18x64xf32>, vector<64x64xf32>, vector<18x64xf32> -> vector<18x64xf32>
    %c0_3 = arith.constant 0 : index
    %c0_4 = arith.constant 0 : index
    %7 = vector.load %arg4[%c0_3, %c0_4] : memref<1x64xf32, #tpu.memory_space<vmem>>, vector<1x64xf32>
    %8 = vector.broadcast %7 : vector<1x64xf32> to vector<18x64xf32>
    %9 = arith.addf %6, %8 : vector<18x64xf32>
    %10 = tpu.iota {dimensions = array<i32: 0>} : vector<18x1xi32>
    %11 = vector.broadcast %1 : i32 to vector<18x1xi32>
    %12 = arith.addi %10, %11 : vector<18x1xi32>
    %c1_i32 = arith.constant 1 : i32
    %13 = vector.broadcast %c1_i32 : i32 to vector<18x1xi32>
    %14 = arith.cmpi sge, %12, %13 : vector<18x1xi32>
    %c16_i32_5 = arith.constant 16 : i32
    %15 = vector.broadcast %c16_i32_5 : i32 to vector<18x1xi32>
    %16 = arith.cmpi sle, %12, %15 : vector<18x1xi32>
    %17 = arith.andi %14, %16 : vector<18x1xi1>
    %cst_6 = arith.constant 0.000000e+00 : f32
    %18 = vector.shape_cast %17 : vector<18x1xi1> to vector<18x1xi1>
    %19 = vector.broadcast %18 : vector<18x1xi1> to vector<18x64xi1>
    %20 = vector.broadcast %cst_6 : f32 to vector<18x64xf32>
    %21 = arith.select %19, %9, %20 : vector<18x64xi1>, vector<18x64xf32>
    %c0_7 = arith.constant 0 : index
    %c0_8 = arith.constant 0 : index
    %22 = vector.load %arg10[%c0_7, %c0_8] : memref<18x64xf32, #tpu.memory_space<vmem>>, vector<18x64xf32>
    tpu.vector_store %arg10[%c0_7, %c0_8], %21 {strides = array<i32>} : memref<18x64xf32, #tpu.memory_space<vmem>>, vector<18x64xf32>,
    %c0_9 = arith.constant 0 : index
    %c0_10 = arith.constant 0 : index
    %23 = vector.load %arg6[%c0_9, %c0_10] : memref<1x64xf32, #tpu.memory_space<vmem>>, vector<1x64xf32>
    %c0_11 = arith.constant 0 : index
    %c0_12 = arith.constant 0 : index
    %24 = vector.load %arg10[%c0_11, %c0_12] : memref<18x64xf32, #tpu.memory_space<vmem>>, vector<16x64xf32>
    %c0_13 = arith.constant 0 : index
    %c0_14 = arith.constant 0 : index
    %c0_15 = arith.constant 0 : index
    %25 = vector.load %arg5[%c0_13, %c0_14, %c0_15] : memref<3x64x64xf32, #tpu.memory_space<vmem>>, vector<1x64x64xf32>
    %26 = vector.shape_cast %25 : vector<1x64x64xf32> to vector<64x64xf32>
    %cst_16 = arith.constant dense<0.000000e+00> : vector<16x64xf32>
    %27 = tpu.matmul %24, %26, %cst_16 {dimension_numbers = #tpu.dot_dimension_numbers<[1], [0], [0], [1], [0, 0, 1, 1], [], []>} : vector<16x64xf32>, vector<64x64xf32>, vector<16x64xf32> -> vector<16x64xf32>
    %28 = vector.broadcast %23 : vector<1x64xf32> to vector<16x64xf32>
    %29 = arith.addf %28, %27 : vector<16x64xf32>
    %c1 = arith.constant 1 : index
    %c0_17 = arith.constant 0 : index
    %30 = vector.load %arg10[%c1, %c0_17] : memref<18x64xf32, #tpu.memory_space<vmem>>, vector<16x64xf32>
    %c1_18 = arith.constant 1 : index
    %c0_19 = arith.constant 0 : index
    %c0_20 = arith.constant 0 : index
    %31 = vector.load %arg5[%c1_18, %c0_19, %c0_20] : memref<3x64x64xf32, #tpu.memory_space<vmem>>, vector<1x64x64xf32>
    %32 = vector.shape_cast %31 : vector<1x64x64xf32> to vector<64x64xf32>
    %cst_21 = arith.constant dense<0.000000e+00> : vector<16x64xf32>
    %33 = tpu.matmul %30, %32, %cst_21 {dimension_numbers = #tpu.dot_dimension_numbers<[1], [0], [0], [1], [0, 0, 1, 1], [], []>} : vector<16x64xf32>, vector<64x64xf32>, vector<16x64xf32> -> vector<16x64xf32>
    %34 = arith.addf %29, %33 : vector<16x64xf32>
    %c2 = arith.constant 2 : index
    %c0_22 = arith.constant 0 : index
    %35 = vector.load %arg10[%c2, %c0_22] : memref<18x64xf32, #tpu.memory_space<vmem>>, vector<16x64xf32>
    %c2_23 = arith.constant 2 : index
    %c0_24 = arith.constant 0 : index
    %c0_25 = arith.constant 0 : index
    %36 = vector.load %arg5[%c2_23, %c0_24, %c0_25] : memref<3x64x64xf32, #tpu.memory_space<vmem>>, vector<1x64x64xf32>
    %37 = vector.shape_cast %36 : vector<1x64x64xf32> to vector<64x64xf32>
    %cst_26 = arith.constant dense<0.000000e+00> : vector<16x64xf32>
    %38 = tpu.matmul %35, %37, %cst_26 {dimension_numbers = #tpu.dot_dimension_numbers<[1], [0], [0], [1], [0, 0, 1, 1], [], []>} : vector<16x64xf32>, vector<64x64xf32>, vector<16x64xf32> -> vector<16x64xf32>
    %39 = arith.addf %34, %38 : vector<16x64xf32>
    %c0_27 = arith.constant 0 : index
    %c0_28 = arith.constant 0 : index
    %c0_29 = arith.constant 0 : index
    %40 = vector.load %arg7[%c0_27, %c0_28, %c0_29] : memref<2x64x128xf32, #tpu.memory_space<vmem>>, vector<1x64x128xf32>
    %41 = vector.shape_cast %40 : vector<1x64x128xf32> to vector<64x128xf32>
    %cst_30 = arith.constant dense<0.000000e+00> : vector<16x128xf32>
    %42 = tpu.matmul %39, %41, %cst_30 {dimension_numbers = #tpu.dot_dimension_numbers<[1], [0], [0], [1], [0, 0, 1, 1], [], []>} : vector<16x64xf32>, vector<64x128xf32>, vector<16x128xf32> -> vector<16x128xf32>
    %c1_31 = arith.constant 1 : index
    %c0_32 = arith.constant 0 : index
    %c0_33 = arith.constant 0 : index
    %43 = vector.load %arg7[%c1_31, %c0_32, %c0_33] : memref<2x64x128xf32, #tpu.memory_space<vmem>>, vector<1x64x128xf32>
    %44 = vector.shape_cast %43 : vector<1x64x128xf32> to vector<64x128xf32>
    %cst_34 = arith.constant dense<0.000000e+00> : vector<16x128xf32>
    %45 = tpu.matmul %39, %44, %cst_34 {dimension_numbers = #tpu.dot_dimension_numbers<[1], [0], [0], [1], [0, 0, 1, 1], [], []>} : vector<16x64xf32>, vector<64x128xf32>, vector<16x128xf32> -> vector<16x128xf32>
    %46 = arith.maximumf %42, %45 : vector<16x128xf32>
    %c0_35 = arith.constant 0 : index
    %c0_36 = arith.constant 0 : index
    %47 = vector.load %arg8[%c0_35, %c0_36] : memref<1x128xf32, #tpu.memory_space<vmem>>, vector<1x128xf32>
    %48 = vector.broadcast %47 : vector<1x128xf32> to vector<16x128xf32>
    %49 = arith.addf %46, %48 : vector<16x128xf32>
    %c0_37 = arith.constant 0 : index
    %c0_38 = arith.constant 0 : index
    %50 = vector.load %arg11[%c0_37, %c0_38] : memref<16x128xf32, #tpu.memory_space<vmem>>, vector<16x128xf32>
    tpu.vector_store %arg11[%c0_37, %c0_38], %49 {strides = array<i32>} : memref<16x128xf32, #tpu.memory_space<vmem>>, vector<16x128xf32>,
    %c0_39 = arith.constant 0 : index
    %c0_40 = arith.constant 0 : index
    %51 = tpu.strided_load %arg11[%c0_39, %c0_40] {strides = array<i32: 2, 1>} : memref<16x128xf32, #tpu.memory_space<vmem>>, vector<8x128xf32>
    %c1_41 = arith.constant 1 : index
    %c0_42 = arith.constant 0 : index
    %52 = tpu.strided_load %arg11[%c1_41, %c0_42] {strides = array<i32: 2, 1>} : memref<16x128xf32, #tpu.memory_space<vmem>>, vector<8x128xf32>
    %53 = arith.maximumf %51, %52 : vector<8x128xf32>
    %c0_43 = arith.constant 0 : index
    %c0_44 = arith.constant 0 : index
    %c0_45 = arith.constant 0 : index
    %54 = vector.load %arg9[%c0_43, %c0_44, %c0_45] : memref<1x8x128xf32, #tpu.memory_space<vmem>>, vector<1x8x128xf32>
    %55 = vector.shape_cast %54 : vector<1x8x128xf32> to vector<8x128xf32>
    %56 = vector.shape_cast %53 : vector<8x128xf32> to vector<1x8x128xf32>
    tpu.vector_store %arg9[%c0_43, %c0_44, %c0_45], %56 {strides = array<i32>} : memref<1x8x128xf32, #tpu.memory_space<vmem>>, vector<1x8x128xf32>,
    return
  }
  func.func @transform_0(%arg0: i32, %arg1: i32) -> (i32, i32, i32) {
    %c0_i32 = arith.constant 0 : i32
    %c0_i32_0 = arith.constant 0 : i32
    %c0_i32_1 = arith.constant 0 : i32
    return %arg0, %c0_i32, %c0_i32_0 : i32, i32, i32
  }
  func.func @transform_1(%arg0: i32, %arg1: i32) -> (i32, i32) {
    %c0_i32 = arith.constant 0 : i32
    %c0_i32_0 = arith.constant 0 : i32
    %c0_i32_1 = arith.constant 0 : i32
    return %c0_i32, %c0_i32_0 : i32, i32
  }
  func.func @transform_2(%arg0: i32, %arg1: i32) -> (i32, i32) {
    %c0_i32 = arith.constant 0 : i32
    %c0_i32_0 = arith.constant 0 : i32
    %c0_i32_1 = arith.constant 0 : i32
    return %c0_i32, %c0_i32_0 : i32, i32
  }
  func.func @transform_3(%arg0: i32, %arg1: i32) -> (i32, i32, i32) {
    %c0_i32 = arith.constant 0 : i32
    %c0_i32_0 = arith.constant 0 : i32
    %c0_i32_1 = arith.constant 0 : i32
    %c0_i32_2 = arith.constant 0 : i32
    return %c0_i32, %c0_i32_0, %c0_i32_1 : i32, i32, i32
  }
  func.func @transform_4(%arg0: i32, %arg1: i32) -> (i32, i32) {
    %c0_i32 = arith.constant 0 : i32
    %c0_i32_0 = arith.constant 0 : i32
    %c0_i32_1 = arith.constant 0 : i32
    return %c0_i32, %c0_i32_0 : i32, i32
  }
  func.func @transform_5(%arg0: i32, %arg1: i32) -> (i32, i32, i32) {
    %c0_i32 = arith.constant 0 : i32
    %c0_i32_0 = arith.constant 0 : i32
    %c0_i32_1 = arith.constant 0 : i32
    %c0_i32_2 = arith.constant 0 : i32
    return %c0_i32, %c0_i32_0, %c0_i32_1 : i32, i32, i32
  }
  func.func @transform_6(%arg0: i32, %arg1: i32) -> (i32, i32) {
    %c0_i32 = arith.constant 0 : i32
    %c0_i32_0 = arith.constant 0 : i32
    %c0_i32_1 = arith.constant 0 : i32
    return %c0_i32, %c0_i32_0 : i32, i32
  }
  func.func @transform_7(%arg0: i32, %arg1: i32) -> (i32, i32, i32) {
    %c0_i32 = arith.constant 0 : i32
    %c0_i32_0 = arith.constant 0 : i32
    return %arg0, %arg1, %c0_i32 : i32, i32, i32
  }
}

module attributes {stable_mosaic.version = 11 : i64} {
  func.func @_res_unit_kernel(%arg0: i32, %arg1: i32, %arg2: memref<1x10x128xf32, #tpu.memory_space<vmem>>, %arg3: memref<128x128xf32, #tpu.memory_space<vmem>>, %arg4: memref<1x128xf32, #tpu.memory_space<vmem>>, %arg5: memref<3x128x128xf32, #tpu.memory_space<vmem>>, %arg6: memref<1x128xf32, #tpu.memory_space<vmem>>, %arg7: memref<1x128x32xf32, #tpu.memory_space<vmem>>, %arg8: memref<1x32xf32, #tpu.memory_space<vmem>>, %arg9: memref<1x8x32xf32, #tpu.memory_space<vmem>>, %arg10: memref<10x128xf32, #tpu.memory_space<vmem>>) attributes {dimension_semantics = [#tpu.dimension_semantics<parallel>, #tpu.dimension_semantics<parallel>], iteration_bounds = array<i64: 2, 1>, scalar_prefetch = 0 : i64, scratch_operands = 1 : i64, tpu.core_type = #tpu.core_type<tc>, window_params = [{transform_indices = @transform_0, window_bounds = array<i64: 1, 10, 128>}, {pipeline_mode = #tpu.pipeline_mode<synchronous>, transform_indices = @transform_1, window_bounds = array<i64: 128, 128>}, {pipeline_mode = #tpu.pipeline_mode<synchronous>, transform_indices = @transform_2, window_bounds = array<i64: 1, 128>}, {pipeline_mode = #tpu.pipeline_mode<synchronous>, transform_indices = @transform_3, window_bounds = array<i64: 3, 128, 128>}, {pipeline_mode = #tpu.pipeline_mode<synchronous>, transform_indices = @transform_4, window_bounds = array<i64: 1, 128>}, {pipeline_mode = #tpu.pipeline_mode<synchronous>, transform_indices = @transform_5, window_bounds = array<i64: 1, 128, 32>}, {pipeline_mode = #tpu.pipeline_mode<synchronous>, transform_indices = @transform_6, window_bounds = array<i64: 1, 32>}, {transform_indices = @transform_7, window_bounds = array<i64: 1, 8, 32>}]} {
    %c8_i32 = arith.constant 8 : i32
    %0 = arith.muli %arg1, %c8_i32 : i32
    %1 = tpu.assume_multiple %0, 8 : i32
    %c0 = arith.constant 0 : index
    %2 = arith.index_cast %1 : i32 to index
    %c0_0 = arith.constant 0 : index
    %3 = vector.load %arg2[%c0, %2, %c0_0] : memref<1x10x128xf32, #tpu.memory_space<vmem>>, vector<1x10x128xf32>
    %4 = vector.shape_cast %3 : vector<1x10x128xf32> to vector<10x128xf32>
    %c0_1 = arith.constant 0 : index
    %c0_2 = arith.constant 0 : index
    %5 = vector.load %arg3[%c0_1, %c0_2] : memref<128x128xf32, #tpu.memory_space<vmem>>, vector<128x128xf32>
    %cst = arith.constant dense<0.000000e+00> : vector<10x128xf32>
    %6 = tpu.matmul %4, %5, %cst {dimension_numbers = #tpu.dot_dimension_numbers<[1], [0], [0], [1], [0, 0, 1, 1], [], []>} : vector<10x128xf32>, vector<128x128xf32>, vector<10x128xf32> -> vector<10x128xf32>
    %c0_3 = arith.constant 0 : index
    %c0_4 = arith.constant 0 : index
    %7 = vector.load %arg4[%c0_3, %c0_4] : memref<1x128xf32, #tpu.memory_space<vmem>>, vector<1x128xf32>
    %8 = vector.broadcast %7 : vector<1x128xf32> to vector<10x128xf32>
    %9 = arith.addf %6, %8 : vector<10x128xf32>
    %10 = tpu.iota {dimensions = array<i32: 0>} : vector<10x1xi32>
    %11 = vector.broadcast %1 : i32 to vector<10x1xi32>
    %12 = arith.addi %10, %11 : vector<10x1xi32>
    %c1_i32 = arith.constant 1 : i32
    %13 = vector.broadcast %c1_i32 : i32 to vector<10x1xi32>
    %14 = arith.cmpi sge, %12, %13 : vector<10x1xi32>
    %c8_i32_5 = arith.constant 8 : i32
    %15 = vector.broadcast %c8_i32_5 : i32 to vector<10x1xi32>
    %16 = arith.cmpi sle, %12, %15 : vector<10x1xi32>
    %17 = arith.andi %14, %16 : vector<10x1xi1>
    %cst_6 = arith.constant 0.000000e+00 : f32
    %18 = vector.shape_cast %17 : vector<10x1xi1> to vector<10x1xi1>
    %19 = vector.broadcast %18 : vector<10x1xi1> to vector<10x128xi1>
    %20 = vector.broadcast %cst_6 : f32 to vector<10x128xf32>
    %21 = arith.select %19, %9, %20 : vector<10x128xi1>, vector<10x128xf32>
    %c0_7 = arith.constant 0 : index
    %c0_8 = arith.constant 0 : index
    %22 = vector.load %arg10[%c0_7, %c0_8] : memref<10x128xf32, #tpu.memory_space<vmem>>, vector<10x128xf32>
    tpu.vector_store %arg10[%c0_7, %c0_8], %21 {strides = array<i32>} : memref<10x128xf32, #tpu.memory_space<vmem>>, vector<10x128xf32>,
    %c0_9 = arith.constant 0 : index
    %c0_10 = arith.constant 0 : index
    %23 = vector.load %arg6[%c0_9, %c0_10] : memref<1x128xf32, #tpu.memory_space<vmem>>, vector<1x128xf32>
    %c0_11 = arith.constant 0 : index
    %c0_12 = arith.constant 0 : index
    %24 = vector.load %arg10[%c0_11, %c0_12] : memref<10x128xf32, #tpu.memory_space<vmem>>, vector<8x128xf32>
    %c0_13 = arith.constant 0 : index
    %c0_14 = arith.constant 0 : index
    %c0_15 = arith.constant 0 : index
    %25 = vector.load %arg5[%c0_13, %c0_14, %c0_15] : memref<3x128x128xf32, #tpu.memory_space<vmem>>, vector<1x128x128xf32>
    %26 = vector.shape_cast %25 : vector<1x128x128xf32> to vector<128x128xf32>
    %cst_16 = arith.constant dense<0.000000e+00> : vector<8x128xf32>
    %27 = tpu.matmul %24, %26, %cst_16 {dimension_numbers = #tpu.dot_dimension_numbers<[1], [0], [0], [1], [0, 0, 1, 1], [], []>} : vector<8x128xf32>, vector<128x128xf32>, vector<8x128xf32> -> vector<8x128xf32>
    %28 = vector.broadcast %23 : vector<1x128xf32> to vector<8x128xf32>
    %29 = arith.addf %28, %27 : vector<8x128xf32>
    %c1 = arith.constant 1 : index
    %c0_17 = arith.constant 0 : index
    %30 = vector.load %arg10[%c1, %c0_17] : memref<10x128xf32, #tpu.memory_space<vmem>>, vector<8x128xf32>
    %c1_18 = arith.constant 1 : index
    %c0_19 = arith.constant 0 : index
    %c0_20 = arith.constant 0 : index
    %31 = vector.load %arg5[%c1_18, %c0_19, %c0_20] : memref<3x128x128xf32, #tpu.memory_space<vmem>>, vector<1x128x128xf32>
    %32 = vector.shape_cast %31 : vector<1x128x128xf32> to vector<128x128xf32>
    %cst_21 = arith.constant dense<0.000000e+00> : vector<8x128xf32>
    %33 = tpu.matmul %30, %32, %cst_21 {dimension_numbers = #tpu.dot_dimension_numbers<[1], [0], [0], [1], [0, 0, 1, 1], [], []>} : vector<8x128xf32>, vector<128x128xf32>, vector<8x128xf32> -> vector<8x128xf32>
    %34 = arith.addf %29, %33 : vector<8x128xf32>
    %c2 = arith.constant 2 : index
    %c0_22 = arith.constant 0 : index
    %35 = vector.load %arg10[%c2, %c0_22] : memref<10x128xf32, #tpu.memory_space<vmem>>, vector<8x128xf32>
    %c2_23 = arith.constant 2 : index
    %c0_24 = arith.constant 0 : index
    %c0_25 = arith.constant 0 : index
    %36 = vector.load %arg5[%c2_23, %c0_24, %c0_25] : memref<3x128x128xf32, #tpu.memory_space<vmem>>, vector<1x128x128xf32>
    %37 = vector.shape_cast %36 : vector<1x128x128xf32> to vector<128x128xf32>
    %cst_26 = arith.constant dense<0.000000e+00> : vector<8x128xf32>
    %38 = tpu.matmul %35, %37, %cst_26 {dimension_numbers = #tpu.dot_dimension_numbers<[1], [0], [0], [1], [0, 0, 1, 1], [], []>} : vector<8x128xf32>, vector<128x128xf32>, vector<8x128xf32> -> vector<8x128xf32>
    %39 = arith.addf %34, %38 : vector<8x128xf32>
    %c0_27 = arith.constant 0 : index
    %c0_28 = arith.constant 0 : index
    %c0_29 = arith.constant 0 : index
    %40 = vector.load %arg7[%c0_27, %c0_28, %c0_29] : memref<1x128x32xf32, #tpu.memory_space<vmem>>, vector<1x128x32xf32>
    %41 = vector.shape_cast %40 : vector<1x128x32xf32> to vector<128x32xf32>
    %cst_30 = arith.constant dense<0.000000e+00> : vector<8x32xf32>
    %42 = tpu.matmul %39, %41, %cst_30 {dimension_numbers = #tpu.dot_dimension_numbers<[1], [0], [0], [1], [0, 0, 1, 1], [], []>} : vector<8x128xf32>, vector<128x32xf32>, vector<8x32xf32> -> vector<8x32xf32>
    %c0_31 = arith.constant 0 : index
    %c0_32 = arith.constant 0 : index
    %43 = vector.load %arg8[%c0_31, %c0_32] : memref<1x32xf32, #tpu.memory_space<vmem>>, vector<1x32xf32>
    %44 = vector.broadcast %43 : vector<1x32xf32> to vector<8x32xf32>
    %45 = arith.addf %42, %44 : vector<8x32xf32>
    %c0_33 = arith.constant 0 : index
    %c0_34 = arith.constant 0 : index
    %c0_35 = arith.constant 0 : index
    %46 = vector.load %arg9[%c0_33, %c0_34, %c0_35] : memref<1x8x32xf32, #tpu.memory_space<vmem>>, vector<1x8x32xf32>
    %47 = vector.shape_cast %46 : vector<1x8x32xf32> to vector<8x32xf32>
    %48 = vector.shape_cast %45 : vector<8x32xf32> to vector<1x8x32xf32>
    tpu.vector_store %arg9[%c0_33, %c0_34, %c0_35], %48 {strides = array<i32>} : memref<1x8x32xf32, #tpu.memory_space<vmem>>, vector<1x8x32xf32>,
    return
  }
  func.func @transform_0(%arg0: i32, %arg1: i32) -> (i32, i32, i32) {
    %c0_i32 = arith.constant 0 : i32
    %c0_i32_0 = arith.constant 0 : i32
    %c0_i32_1 = arith.constant 0 : i32
    return %arg0, %c0_i32, %c0_i32_0 : i32, i32, i32
  }
  func.func @transform_1(%arg0: i32, %arg1: i32) -> (i32, i32) {
    %c0_i32 = arith.constant 0 : i32
    %c0_i32_0 = arith.constant 0 : i32
    %c0_i32_1 = arith.constant 0 : i32
    return %c0_i32, %c0_i32_0 : i32, i32
  }
  func.func @transform_2(%arg0: i32, %arg1: i32) -> (i32, i32) {
    %c0_i32 = arith.constant 0 : i32
    %c0_i32_0 = arith.constant 0 : i32
    %c0_i32_1 = arith.constant 0 : i32
    return %c0_i32, %c0_i32_0 : i32, i32
  }
  func.func @transform_3(%arg0: i32, %arg1: i32) -> (i32, i32, i32) {
    %c0_i32 = arith.constant 0 : i32
    %c0_i32_0 = arith.constant 0 : i32
    %c0_i32_1 = arith.constant 0 : i32
    %c0_i32_2 = arith.constant 0 : i32
    return %c0_i32, %c0_i32_0, %c0_i32_1 : i32, i32, i32
  }
  func.func @transform_4(%arg0: i32, %arg1: i32) -> (i32, i32) {
    %c0_i32 = arith.constant 0 : i32
    %c0_i32_0 = arith.constant 0 : i32
    %c0_i32_1 = arith.constant 0 : i32
    return %c0_i32, %c0_i32_0 : i32, i32
  }
  func.func @transform_5(%arg0: i32, %arg1: i32) -> (i32, i32, i32) {
    %c0_i32 = arith.constant 0 : i32
    %c0_i32_0 = arith.constant 0 : i32
    %c0_i32_1 = arith.constant 0 : i32
    %c0_i32_2 = arith.constant 0 : i32
    return %c0_i32, %c0_i32_0, %c0_i32_1 : i32, i32, i32
  }
  func.func @transform_6(%arg0: i32, %arg1: i32) -> (i32, i32) {
    %c0_i32 = arith.constant 0 : i32
    %c0_i32_0 = arith.constant 0 : i32
    %c0_i32_1 = arith.constant 0 : i32
    return %c0_i32, %c0_i32_0 : i32, i32
  }
  func.func @transform_7(%arg0: i32, %arg1: i32) -> (i32, i32, i32) {
    %c0_i32 = arith.constant 0 : i32
    %c0_i32_0 = arith.constant 0 : i32
    return %arg0, %arg1, %c0_i32 : i32, i32, i32
  }
}

</mosaic_0001>

<llo_original>
// kernel: feature_branch_forward.2
$region0: #{feature_branch_forward.2}
  #allocation0 [shape = 'u32[]', space=smem, size = 0x4, offset = 0x4, fixed_abs, tag = 'smem constant byte address 0x4 - core index']
  #allocation1 [shape = 'u32[72,128]{1,0:T(1,128)}', space=vmem, size = 0x9000, scoped, tag = 'internal scratch']
  #allocation2 [shape = 'f32[18,64]{1,0:T(8,128)}', space=vmem, size = 0x3000, scoped, tag = 'scratch operand']
  #allocation3 [shape = 'f32[16,128]{1,0:T(8,128)}', space=vmem, size = 0x2000, scoped, tag = 'scratch operand']
  %s0 = inlined_call_operand.vmem [shape: f32[2,18,64], index: 0, kind: input, shape index: {}]
  %s1 = inlined_call_operand.vmem [shape: f32[64,64], index: 1, kind: input, shape index: {}]
  %s2 = inlined_call_operand.vmem [shape: f32[1,64], index: 2, kind: input, shape index: {}]
  %s3 = inlined_call_operand.vmem [shape: f32[3,64,64], index: 3, kind: input, shape index: {}]
  %s4 = inlined_call_operand.vmem [shape: f32[1,64], index: 4, kind: input, shape index: {}]
  %s5 = inlined_call_operand.vmem [shape: f32[2,64,128], index: 5, kind: input, shape index: {}]
  %s6 = inlined_call_operand.vmem [shape: f32[1,128], index: 6, kind: input, shape index: {}]
  %s7 = inlined_call_operand.vmem [shape: f32[2,8,128], index: 7, kind: output, shape index: {}]
  %s8 = sld [smem:[#allocation0]]
  $region61: #{feature_branch_forward.2} parent=0
    _
  %s10 = ssub.s32 1, %s8
  %s11 = scalar_select 0, %s10, %s8
  loop: start=0, step=1, limit=4
  $region2: #{feature_branch_forward.2} parent=0 // loop_pre_header
    _
  $region3: #{feature_branch_forward.2} parent=0 // loop_header
    %s13 = sphi 0, %s17
    %p14 = scmp.ge.s32.totalorder %s13, 4
    %s20 = sphi 0, %s32
    %s21 = sphi 0, %s28
    %s22 = sphi 0, %s20
    %s23 = sphi 0, %s21
    %s24 = sphi 0, %s22
    %s25 = sphi 0, %s23
    %s35 = sphi 0, %s37
    %s38 = sphi 0, %s35
    %s39 = sphi 0, %s38
    %s55 = sphi 0, %s39
    %s59 = sphi 0, %s59
    %s61 = sphi 0, %s59
    %s62 = sphi 0, %s61
    %s76 = sphi 0, %s62
    %s80 = sphi 0, %s80
    %s82 = sphi 0, %s80
    %s83 = sphi 0, %s82
    %s97 = sphi 0, %s83
    %s101 = sphi 0, %s101
    %s103 = sphi 0, %s101
    %s104 = sphi 0, %s103
    %s118 = sphi 0, %s104
    %s122 = sphi 0, %s122
    %s124 = sphi 0, %s122
    %s125 = sphi 0, %s124
    %s139 = sphi 0, %s125
    %s143 = sphi 0, %s143
    %s145 = sphi 0, %s143
    %s146 = sphi 0, %s145
    %s160 = sphi 0, %s146
    %s164 = sphi 0, %s164
    %s166 = sphi 0, %s164
    %s167 = sphi 0, %s166
    %s181 = sphi 0, %s167
    %s189 = sphi 0, %s191
    %s192 = sphi 0, %s189
    %s193 = sphi 0, %s192
    %s209 = sphi 0, %s193
  $region4: #{feature_branch_forward.2} parent=0 // loop_header_branch
    %16 = sbr.rel (%p14) target = $region8
  $region5: #{feature_branch_forward.2} parent=0 // loop_body
    %s18 = ssub.s32 %s13, 1
    %s19 = ssub.s32 %s13, 2
    %s26 = sadd.s32 1, %s21
    %p27 = scmp.ge.s32.totalorder %s26, 1
    %s28 = scalar_select %p27, 0, %s26
    %s29 = sadd.s32 1, %s20
    %s30 = scalar_select %p27, %s29, %s20
    %p31 = scmp.ge.s32.totalorder %s30, 2
    %s32 = scalar_select %p31, 0, %s30
    %s33 = ssub.s32 %s20, %s32
    %p34 = scmp.eq.s32.totalorder %s33, 0
    %s36 = sadd.s32 %s35, 1
    %s37 = scalar_select %p34, %s35, %s36
    %p40 = pneg %p34
    %p41 = scmp.eq.s32.totalorder %s13, 1
    %p42 = por %p40, %p41
    %p43 = scmp.ne.s32.totalorder %s35, %s38
    %p44 = scmp.eq.s32.totalorder %s13, 0
    %p45 = por %p43, %p44
    %p46 = scmp.ne.s32.totalorder %s35, %s38
    %p47 = scmp.eq.s32.totalorder %s18, 1
    %p48 = por %p46, %p47
    %p49 = scmp.ne.s32.totalorder %s38, %s39
    %p50 = scmp.eq.s32.totalorder %s18, 0
    %p51 = por %p49, %p50
    %p52 = scmp.ne.s32.totalorder %s38, %s39
    %p53 = scmp.eq.s32.totalorder %s19, 1
    %p54 = por %p52, %p53
    %p56 = scmp.ne.s32.totalorder %s39, %s55
    %p57 = scmp.eq.s32.totalorder %s19, 0
    %p58 = por %p56, %p57
    %s60 = sadd.s32 %s59, 1
    %p63 = scmp.eq.s32.totalorder %s13, 1
    %p64 = scmp.ne.s32.totalorder %s59, %s61
    %p65 = scmp.eq.s32.totalorder %s13, 0
    %p66 = por %p64, %p65
    %p67 = scmp.ne.s32.totalorder %s59, %s61
    %p68 = scmp.eq.s32.totalorder %s18, 1
    %p69 = por %p67, %p68
    %p70 = scmp.ne.s32.totalorder %s61, %s62
    %p71 = scmp.eq.s32.totalorder %s18, 0
    %p72 = por %p70, %p71
    %p73 = scmp.ne.s32.totalorder %s61, %s62
    %p74 = scmp.eq.s32.totalorder %s19, 1
    %p75 = por %p73, %p74
    %p77 = scmp.ne.s32.totalorder %s62, %s76
    %p78 = scmp.eq.s32.totalorder %s19, 0
    %p79 = por %p77, %p78
    %s81 = sadd.s32 %s80, 1
    %p84 = scmp.eq.s32.totalorder %s13, 1
    %p85 = scmp.ne.s32.totalorder %s80, %s82
    %p86 = scmp.eq.s32.totalorder %s13, 0
    %p87 = por %p85, %p86
    %p88 = scmp.ne.s32.totalorder %s80, %s82
    %p89 = scmp.eq.s32.totalorder %s18, 1
    %p90 = por %p88, %p89
    %p91 = scmp.ne.s32.totalorder %s82, %s83
    %p92 = scmp.eq.s32.totalorder %s18, 0
    %p93 = por %p91, %p92
    %p94 = scmp.ne.s32.totalorder %s82, %s83
    %p95 = scmp.eq.s32.totalorder %s19, 1
    %p96 = por %p94, %p95
    %p98 = scmp.ne.s32.totalorder %s83, %s97
    %p99 = scmp.eq.s32.totalorder %s19, 0
    %p100 = por %p98, %p99
    %s102 = sadd.s32 %s101, 1
    %p105 = scmp.eq.s32.totalorder %s13, 1
    %p106 = scmp.ne.s32.totalorder %s101, %s103
    %p107 = scmp.eq.s32.totalorder %s13, 0
    %p108 = por %p106, %p107
    %p109 = scmp.ne.s32.totalorder %s101, %s103
    %p110 = scmp.eq.s32.totalorder %s18, 1
    %p111 = por %p109, %p110
    %p112 = scmp.ne.s32.totalorder %s103, %s104
    %p113 = scmp.eq.s32.totalorder %s18, 0
    %p114 = por %p112, %p113
    %p115 = scmp.ne.s32.totalorder %s103, %s104
    %p116 = scmp.eq.s32.totalorder %s19, 1
    %p117 = por %p115, %p116
    %p119 = scmp.ne.s32.totalorder %s104, %s118
    %p120 = scmp.eq.s32.totalorder %s19, 0
    %p121 = por %p119, %p120
    %s123 = sadd.s32 %s122, 1
    %p126 = scmp.eq.s32.totalorder %s13, 1
    %p127 = scmp.ne.s32.totalorder %s122, %s124
    %p128 = scmp.eq.s32.totalorder %s13, 0
    %p129 = por %p127, %p128
    %p130 = scmp.ne.s32.totalorder %s122, %s124
    %p131 = scmp.eq.s32.totalorder %s18, 1
    %p132 = por %p130, %p131
    %p133 = scmp.ne.s32.totalorder %s124, %s125
    %p134 = scmp.eq.s32.totalorder %s18, 0
    %p135 = por %p133, %p134
    %p136 = scmp.ne.s32.totalorder %s124, %s125
    %p137 = scmp.eq.s32.totalorder %s19, 1
    %p138 = por %p136, %p137
    %p140 = scmp.ne.s32.totalorder %s125, %s139
    %p141 = scmp.eq.s32.totalorder %s19, 0
    %p142 = por %p140, %p141
    %s144 = sadd.s32 %s143, 1
    %p147 = scmp.eq.s32.totalorder %s13, 1
    %p148 = scmp.ne.s32.totalorder %s143, %s145
    %p149 = scmp.eq.s32.totalorder %s13, 0
    %p150 = por %p148, %p149
    %p151 = scmp.ne.s32.totalorder %s143, %s145
    %p152 = scmp.eq.s32.totalorder %s18, 1
    %p153 = por %p151, %p152
    %p154 = scmp.ne.s32.totalorder %s145, %s146
    %p155 = scmp.eq.s32.totalorder %s18, 0
    %p156 = por %p154, %p155
    %p157 = scmp.ne.s32.totalorder %s145, %s146
    %p158 = scmp.eq.s32.totalorder %s19, 1
    %p159 = por %p157, %p158
    %p161 = scmp.ne.s32.totalorder %s146, %s160
    %p162 = scmp.eq.s32.totalorder %s19, 0
    %p163 = por %p161, %p162
    %s165 = sadd.s32 %s164, 1
    %p168 = scmp.eq.s32.totalorder %s13, 1
    %p169 = scmp.ne.s32.totalorder %s164, %s166
    %p170 = scmp.eq.s32.totalorder %s13, 0
    %p171 = por %p169, %p170
    %p172 = scmp.ne.s32.totalorder %s164, %s166
    %p173 = scmp.eq.s32.totalorder %s18, 1
    %p174 = por %p172, %p173
    %p175 = scmp.ne.s32.totalorder %s166, %s167
    %p176 = scmp.eq.s32.totalorder %s18, 0
    %p177 = por %p175, %p176
    %p178 = scmp.ne.s32.totalorder %s166, %s167
    %p179 = scmp.eq.s32.totalorder %s19, 1
    %p180 = por %p178, %p179
    %p182 = scmp.ne.s32.totalorder %s167, %s181
    %p183 = scmp.eq.s32.totalorder %s19, 0
    %p184 = por %p182, %p183
    %s185 = ssub.s32 %s20, %s32
    %s186 = ssub.s32 %s21, %s28
    %s187 = sor.u32 %s185, %s186
    %p188 = scmp.eq.s32.totalorder %s187, 0
    %s190 = sadd.s32 %s189, 1
    %s191 = scalar_select %p188, %s189, %s190
    %p194 = pneg %p188
    %p195 = scmp.eq.s32.totalorder %s13, 1
    %p196 = por %p194, %p195
    %p197 = scmp.ne.s32.totalorder %s189, %s192
    %p198 = scmp.eq.s32.totalorder %s13, 0
    %p199 = por %p197, %p198
    %p200 = scmp.ne.s32.totalorder %s189, %s192
    %p201 = scmp.eq.s32.totalorder %s18, 1
    %p202 = por %p200, %p201
    %p203 = scmp.ne.s32.totalorder %s192, %s193
    %p204 = scmp.eq.s32.totalorder %s18, 0
    %p205 = por %p203, %p204
    %p206 = scmp.ne.s32.totalorder %s192, %s193
    %p207 = scmp.eq.s32.totalorder %s19, 1
    %p208 = por %p206, %p207
    %p210 = scmp.ne.s32.totalorder %s193, %s209
    %p211 = scmp.eq.s32.totalorder %s19, 0
    %p212 = por %p210, %p211
    %p213 = scmp.le.s32.totalorder 1, %s13
    %p214 = scmp.lt.s32.totalorder %s13, 3
    %p215 = pnand %p213, %p214
    %p216 = pneg %p215
    // Predicated region
    $region9: #{feature_branch_forward.2} parent=5 // pred_check
      _
    $region10: #{feature_branch_forward.2} parent=5 // pred_check_branch
      %218 = sbr.rel (%p215) target = $region12
    $region11: #{feature_branch_forward.2} parent=5 // pred_region
      %s219 = ssub.s32 %s13, 1
      // Predicated region
      $region13: #{feature_branch_forward.2} parent=11 // pred_check
        %p220 = pneg %p72
      $region14: #{feature_branch_forward.2} parent=11 // pred_check_branch
        %222 = sbr.rel (%p220) target = $region16
      $region15: #{feature_branch_forward.2} parent=11 // pred_region
        _
      $region16: #{feature_branch_forward.2} parent=11 // pred_fallthru
        _
      // Predicated region
      $region17: #{feature_branch_forward.2} parent=11 // pred_check
        %p223 = pneg %p93
      $region18: #{feature_branch_forward.2} parent=11 // pred_check_branch
        %225 = sbr.rel (%p223) target = $region20
      $region19: #{feature_branch_forward.2} parent=11 // pred_region
        _
      $region20: #{feature_branch_forward.2} parent=11 // pred_fallthru
        _
      // Predicated region
      $region21: #{feature_branch_forward.2} parent=11 // pred_check
        %p226 = pneg %p114
      $region22: #{feature_branch_forward.2} parent=11 // pred_check_branch
        %228 = sbr.rel (%p226) target = $region24
      $region23: #{feature_branch_forward.2} parent=11 // pred_region
        _
      $region24: #{feature_branch_forward.2} parent=11 // pred_fallthru
        _
      // Predicated region
      $region25: #{feature_branch_forward.2} parent=11 // pred_check
        %p229 = pneg %p135
      $region26: #{feature_branch_forward.2} parent=11 // pred_check_branch
        %231 = sbr.rel (%p229) target = $region28
      $region27: #{feature_branch_forward.2} parent=11 // pred_region
        _
      $region28: #{feature_branch_forward.2} parent=11 // pred_fallthru
        _
      // Predicated region
      $region29: #{feature_branch_forward.2} parent=11 // pred_check
        %p232 = pneg %p156
      $region30: #{feature_branch_forward.2} parent=11 // pred_check_branch
        %234 = sbr.rel (%p232) target = $region32
      $region31: #{feature_branch_forward.2} parent=11 // pred_region
        _
      $region32: #{feature_branch_forward.2} parent=11 // pred_fallthru
        _
      // Predicated region
      $region33: #{feature_branch_forward.2} parent=11 // pred_check
        %p235 = pneg %p177
      $region34: #{feature_branch_forward.2} parent=11 // pred_check_branch
        %237 = sbr.rel (%p235) target = $region36
      $region35: #{feature_branch_forward.2} parent=11 // pred_region
        _
      $region36: #{feature_branch_forward.2} parent=11 // pred_fallthru
        _
    $region12: #{feature_branch_forward.2} parent=5 // pred_fallthru
      _
    %p238 = scmp.lt.s32.totalorder %s13, 2
    // Predicated region
    $region37: #{feature_branch_forward.2} parent=5 // pred_check
      %p239 = pneg %p238
    $region38: #{feature_branch_forward.2} parent=5 // pred_check_branch
      %241 = sbr.rel (%p239) target = $region40
    $region39: #{feature_branch_forward.2} parent=5 // pred_region
      // Predicated region
      $region41: #{feature_branch_forward.2} parent=39 // pred_check
        %p242 = pneg %p45
      $region42: #{feature_branch_forward.2} parent=39 // pred_check_branch
        %244 = sbr.rel (%p242) target = $region44
      $region43: #{feature_branch_forward.2} parent=39 // pred_region
        %p245 = scmp.lt.s32.totalorder %s20, 1
        %s246 = scalar_select %p245, %s20, 1
        %s247 = smul.addr %s246, 3
        %s248 = smul.addr %s247, 8
        %s249 = scalar_lea.vmem %s0, %s248
      $region44: #{feature_branch_forward.2} parent=39 // pred_fallthru
        _
    $region40: #{feature_branch_forward.2} parent=5 // pred_fallthru
      _
    %p250 = scmp.le.s32.totalorder 1, %s13
    %p251 = scmp.lt.s32.totalorder %s13, 3
    %p252 = pnand %p250, %p251
    %p253 = pneg %p252
    // Predicated region
    $region45: #{feature_branch_forward.2} parent=5 // pred_check
      _
    $region46: #{feature_branch_forward.2} parent=5 // pred_check_branch
      %255 = sbr.rel (%p252) target = $region48
    $region47: #{feature_branch_forward.2} parent=5 // pred_region
      %s256 = ssub.s32 %s13, 1
      %p257 = scmp.lt.s32.totalorder %s22, 1
      %s258 = scalar_select %p257, %s22, 1
      %s259 = smul.addr %s258, 3
      %s260 = smul.addr %s259, 8
      %s261 = scalar_lea.vmem %s0, %s260
      %p262 = pneg %p51
      %p263 = pneg %p48
      %p264 = pneg %p72
      %p265 = pneg %p69
      %p266 = pneg %p93
      %p267 = pneg %p90
      %p268 = pneg %p114
      %p269 = pneg %p111
      %p270 = pneg %p135
      %p271 = pneg %p132
      %p272 = pneg %p156
      %p273 = pneg %p153
      %p274 = pneg %p177
      %p275 = pneg %p174
      %p276 = pneg %p205
      %p277 = pneg %p202
      %p278 = scmp.lt.s32.totalorder %s22, 1
      %s279 = scalar_select %p278, %s22, 1
      %p280 = scmp.lt.s32.totalorder %s23, 0
      %s281 = scalar_select %p280, %s23, 0
      %s282 = sadd.s32 %s281, %s279
      %s283 = smul.addr %s282, 8
      %s284 = scalar_lea.vmem %s7, %s283
      %p285 = scmp.lt.s32.totalorder %s22, 1
      %s286 = scalar_select %p285, %s22, 1
      %s287 = smul.addr %s286, 3
      %s288 = smul.addr %s287, 8
      %s289 = scalar_lea.vmem %s0, %s288
      %p290 = scmp.lt.s32.totalorder %s22, 1
      %s291 = scalar_select %p290, %s22, 1
      %p292 = scmp.lt.s32.totalorder %s23, 0
      %s293 = scalar_select %p292, %s23, 0
      %s294 = sadd.s32 %s293, %s291
      %s295 = smul.addr %s294, 8
      %s296 = scalar_lea.vmem %s7, %s295
      %s297 = smul.u32 %s23, 16
      %s298 = scalar_lea.vmem %s289, %s297
      %v299 = vld [vmem:[%s298] sm:$0xff]
      %v300 = vld [vmem:[%s298 + $0x8] sm:$0xff]
      %v301 = vld [vmem:[%s298 + $0x10] sm:$0x3]
      %v302 = vld [vmem:[%s1] sm:$0xff]
      %v303 = vld [vmem:[%s1 + $0x8] sm:$0xff]
      %v304 = vld [vmem:[%s1 + $0x10] sm:$0xff]
      %v305 = vld [vmem:[%s1 + $0x18] sm:$0xff]
      %v306 = vld [vmem:[%s1 + $0x20] sm:$0xff]
      %v307 = vld [vmem:[%s1 + $0x28] sm:$0xff]
      %v308 = vld [vmem:[%s1 + $0x30] sm:$0xff]
      %v309 = vld [vmem:[%s1 + $0x38] sm:$0xff]
      %v310 = vld [vmem:[%s2] sm:$0x1]
      %v312 = vperm.slane %v310, 0
      %vm314 = vcmask 523264
      %v316 = vsel %vm314, %v299, 0
      %v319 = vsel %vm314, %v300, 0
      %v322 = vsel %vm314, %v301, 0
      %324 = vmatpush.msra.mxu0 0.0
      %325 = vmatpush.msra.mxu0 0.0
      %326 = vmatpush.msra.mxu0 0.0
      %327 = vmatpush.msra.mxu0 0.0
      %328 = vmatpush.msra.mxu0 0.0
      %329 = vmatpush.msra.mxu0 0.0
      %330 = vmatpush.msra.mxu0 0.0
      %331 = vmatpush.msra.mxu0 0.0
      %332 = vmatpush.msra.mxu0 %v309
      %333 = vmatpush.msra.mxu0 %v308
      %334 = vmatpush.msra.mxu0 %v307
      %335 = vmatpush.msra.mxu0 %v306
      %336 = vmatpush.msra.mxu0 %v305
      %337 = vmatpush.msra.mxu0 %v304
      %338 = vmatpush.msra.mxu0 %v303
      %339 = vmatpush.msra.mxu0 %v302
      %340 = vmatmul.f32.gmra.mxu0 %v316
      %v341 = vpop.f32.mrf.mxu0
      %v342 = vadd.f32 %v312, %v341
      %343 = vmatmul.f32.gmra.mxu0 %v319
      %v344 = vpop.f32.mrf.mxu0
      %v345 = vadd.f32 %v312, %v344
      %346 = vmatmul.f32.gmra.mxu0 %v322
      %v347 = vpop.f32.mrf.mxu0
      %v348 = vadd.f32 %v312, %v347
      %349 = vdwg.mxu0
      %v350 = vlaneseq
      %v351 = vshrl.u32 %v350, 7
      %v352 = vadd.s32 %v351, 8
      %v353 = vadd.s32 %v351, 16
      %v354 = vstv %s297
      %v355 = vadd.s32 %v351, %v354
      %v356 = vadd.s32 %v352, %v354
      %v357 = vadd.s32 %v353, %v354
      %vm358 = vcmp.ge.s32.totalorder %v355, 1
      %vm359 = vcmp.ge.s32.totalorder %v356, 1
      %vm360 = vcmp.ge.s32.totalorder %v357, 1
      %vm361 = vcmp.le.s32.totalorder %v355, 16
      %vm362 = vcmp.le.s32.totalorder %v356, 16
      %vm363 = vcmp.le.s32.totalorder %v357, 16
      %vm364 = vmand %vm358, %vm361
      %vm365 = vmand %vm359, %vm362
      %vm366 = vmand %vm360, %vm363
      %v367 = vsel %vm364, 1, 0
      %v368 = vsel %vm365, 1, 0
      %v369 = vsel %vm366, 1, 0
      %vm370 = vcmp.eq.s32.totalorder %v367, 1
      %vm371 = vcmp.eq.s32.totalorder %v368, 1
      %vm372 = vcmp.eq.s32.totalorder %v369, 1
      %v373 = vsel %vm370, %v342, 0.0
      %v374 = vsel %vm371, %v345, 0.0
      %v375 = vsel %vm372, %v348, 0.0
      %376 = vst.msk [vmem:[#allocation2] sm:$0xff] %vm314, %v373
      %377 = vst.msk [vmem:[#allocation2 + $0x8] sm:$0xff] %vm314, %v374
      %vm378 = vcmask 517120
      %379 = vst.msk [vmem:[#allocation2 + $0x10] sm:$0x3] %vm378, %v375
      %v380 = vld [vmem:[%s4] sm:$0x1]
      %v381 = vld [vmem:[#allocation2] sm:$0xff]
      %v382 = vld [vmem:[#allocation2 + $0x8] sm:$0xff]
      %v383 = vld [vmem:[%s3] sm:$0xff]
      %v384 = vld [vmem:[%s3 + $0x8] sm:$0xff]
      %v385 = vld [vmem:[%s3 + $0x10] sm:$0xff]
      %v386 = vld [vmem:[%s3 + $0x18] sm:$0xff]
      %v387 = vld [vmem:[%s3 + $0x20] sm:$0xff]
      %v388 = vld [vmem:[%s3 + $0x28] sm:$0xff]
      %v389 = vld [vmem:[%s3 + $0x30] sm:$0xff]
      %v390 = vld [vmem:[%s3 + $0x38] sm:$0xff]
      %v392 = vsel %vm314, %v381, 0
      %v395 = vsel %vm314, %v382, 0
      %397 = vmatpush.msra.mxu0 0.0
      %398 = vmatpush.msra.mxu0 0.0
      %399 = vmatpush.msra.mxu0 0.0
      %400 = vmatpush.msra.mxu0 0.0
      %401 = vmatpush.msra.mxu0 0.0
      %402 = vmatpush.msra.mxu0 0.0
      %403 = vmatpush.msra.mxu0 0.0
      %404 = vmatpush.msra.mxu0 0.0
      %405 = vmatpush.msra.mxu0 %v390
      %406 = vmatpush.msra.mxu0 %v389
      %407 = vmatpush.msra.mxu0 %v388
      %408 = vmatpush.msra.mxu0 %v387
      %409 = vmatpush.msra.mxu0 %v386
      %410 = vmatpush.msra.mxu0 %v385
      %411 = vmatpush.msra.mxu0 %v384
      %412 = vmatpush.msra.mxu0 %v383
      %413 = vmatmul.f32.gmra.mxu0 %v392
      %v414 = vpop.f32.mrf.mxu0
      %v415 = vadd.f32 0.0, %v414
      %416 = vmatmul.f32.gmra.mxu0 %v395
      %v417 = vpop.f32.mrf.mxu0
      %v418 = vadd.f32 0.0, %v417
      %419 = vdwg.mxu0
      %v421 = vperm.slane %v380, 0
      %v423 = vadd.f32 %v421, %v415
      %v424 = vadd.f32 %v421, %v418
      %v425 = vld [vmem:[#allocation2 + $0x1] sm:$0xff]
      %v426 = vld [vmem:[#allocation2 + $0x9] sm:$0xff]
      %s427 = scalar_lea.vmem %s3, 64
      %v428 = vld [vmem:[%s427] sm:$0xff]
      %v429 = vld [vmem:[%s427 + $0x8] sm:$0xff]
      %v430 = vld [vmem:[%s427 + $0x10] sm:$0xff]
      %v431 = vld [vmem:[%s427 + $0x18] sm:$0xff]
      %v432 = vld [vmem:[%s427 + $0x20] sm:$0xff]
      %v433 = vld [vmem:[%s427 + $0x28] sm:$0xff]
      %v434 = vld [vmem:[%s427 + $0x30] sm:$0xff]
      %v435 = vld [vmem:[%s427 + $0x38] sm:$0xff]
      %v437 = vsel %vm314, %v425, 0
      %v440 = vsel %vm314, %v426, 0
      %442 = vmatpush.msra.mxu0 0.0
      %443 = vmatpush.msra.mxu0 0.0
      %444 = vmatpush.msra.mxu0 0.0
      %445 = vmatpush.msra.mxu0 0.0
      %446 = vmatpush.msra.mxu0 0.0
      %447 = vmatpush.msra.mxu0 0.0
      %448 = vmatpush.msra.mxu0 0.0
      %449 = vmatpush.msra.mxu0 0.0
      %450 = vmatpush.msra.mxu0 %v435
      %451 = vmatpush.msra.mxu0 %v434
      %452 = vmatpush.msra.mxu0 %v433
      %453 = vmatpush.msra.mxu0 %v432
      %454 = vmatpush.msra.mxu0 %v431
      %455 = vmatpush.msra.mxu0 %v430
      %456 = vmatpush.msra.mxu0 %v429
      %457 = vmatpush.msra.mxu0 %v428
      %458 = vmatmul.f32.gmra.mxu0 %v437
      %v459 = vpop.f32.mrf.mxu0
      %v460 = vadd.f32 0.0, %v459
      %461 = vmatmul.f32.gmra.mxu0 %v440
      %v462 = vpop.f32.mrf.mxu0
      %v463 = vadd.f32 0.0, %v462
      %464 = vdwg.mxu0
      %v465 = vadd.f32 %v423, %v460
      %v466 = vadd.f32 %v424, %v463
      %v467 = vld [vmem:[#allocation2 + $0x2] sm:$0xff]
      %v468 = vld [vmem:[#allocation2 + $0xa] sm:$0xff]
      %s469 = scalar_lea.vmem %s3, 128
      %v470 = vld [vmem:[%s469] sm:$0xff]
      %v471 = vld [vmem:[%s469 + $0x8] sm:$0xff]
      %v472 = vld [vmem:[%s469 + $0x10] sm:$0xff]
      %v473 = vld [vmem:[%s469 + $0x18] sm:$0xff]
      %v474 = vld [vmem:[%s469 + $0x20] sm:$0xff]
      %v475 = vld [vmem:[%s469 + $0x28] sm:$0xff]
      %v476 = vld [vmem:[%s469 + $0x30] sm:$0xff]
      %v477 = vld [vmem:[%s469 + $0x38] sm:$0xff]
      %v479 = vsel %vm314, %v467, 0
      %v482 = vsel %vm314, %v468, 0
      %484 = vmatpush.msra.mxu0 0.0
      %485 = vmatpush.msra.mxu0 0.0
      %486 = vmatpush.msra.mxu0 0.0
      %487 = vmatpush.msra.mxu0 0.0
      %488 = vmatpush.msra.mxu0 0.0
      %489 = vmatpush.msra.mxu0 0.0
      %490 = vmatpush.msra.mxu0 0.0
      %491 = vmatpush.msra.mxu0 0.0
      %492 = vmatpush.msra.mxu0 %v477
      %493 = vmatpush.msra.mxu0 %v476
      %494 = vmatpush.msra.mxu0 %v475
      %495 = vmatpush.msra.mxu0 %v474
      %496 = vmatpush.msra.mxu0 %v473
      %497 = vmatpush.msra.mxu0 %v472
      %498 = vmatpush.msra.mxu0 %v471
      %499 = vmatpush.msra.mxu0 %v470
      %500 = vmatmul.f32.gmra.mxu0 %v479
      %v501 = vpop.f32.mrf.mxu0
      %v502 = vadd.f32 0.0, %v501
      %503 = vmatmul.f32.gmra.mxu0 %v482
      %v504 = vpop.f32.mrf.mxu0
      %v505 = vadd.f32 0.0, %v504
      %506 = vdwg.mxu0
      %v507 = vadd.f32 %v465, %v502
      %v508 = vadd.f32 %v466, %v505
      %v509 = vld [vmem:[%s5] sm:$0xff]
      %v510 = vld [vmem:[%s5 + $0x8] sm:$0xff]
      %v511 = vld [vmem:[%s5 + $0x10] sm:$0xff]
      %v512 = vld [vmem:[%s5 + $0x18] sm:$0xff]
      %v513 = vld [vmem:[%s5 + $0x20] sm:$0xff]
      %v514 = vld [vmem:[%s5 + $0x28] sm:$0xff]
      %v515 = vld [vmem:[%s5 + $0x30] sm:$0xff]
      %v516 = vld [vmem:[%s5 + $0x38] sm:$0xff]
      %v518 = vsel %vm314, %v507, 0
      %v521 = vsel %vm314, %v508, 0
      %523 = vmatpush.msra.mxu0 0.0
      %524 = vmatpush.msra.mxu0 0.0
      %525 = vmatpush.msra.mxu0 0.0
      %526 = vmatpush.msra.mxu0 0.0
      %527 = vmatpush.msra.mxu0 0.0
      %528 = vmatpush.msra.mxu0 0.0
      %529 = vmatpush.msra.mxu0 0.0
      %530 = vmatpush.msra.mxu0 0.0
      %531 = vmatpush.msra.mxu0 %v516
      %532 = vmatpush.msra.mxu0 %v515
      %533 = vmatpush.msra.mxu0 %v514
      %534 = vmatpush.msra.mxu0 %v513
      %535 = vmatpush.msra.mxu0 %v512
      %536 = vmatpush.msra.mxu0 %v511
      %537 = vmatpush.msra.mxu0 %v510
      %538 = vmatpush.msra.mxu0 %v509
      %539 = vmatmul.f32.gmra.mxu0 %v518
      %v540 = vpop.f32.mrf.mxu0
      %v541 = vadd.f32 0.0, %v540
      %542 = vmatmul.f32.gmra.mxu0 %v521
      %v543 = vpop.f32.mrf.mxu0
      %v544 = vadd.f32 0.0, %v543
      %545 = vdwg.mxu0
      %s546 = scalar_lea.vmem %s5, 64
      %v547 = vld [vmem:[%s546] sm:$0xff]
      %v548 = vld [vmem:[%s546 + $0x8] sm:$0xff]
      %v549 = vld [vmem:[%s546 + $0x10] sm:$0xff]
      %v550 = vld [vmem:[%s546 + $0x18] sm:$0xff]
      %v551 = vld [vmem:[%s546 + $0x20] sm:$0xff]
      %v552 = vld [vmem:[%s546 + $0x28] sm:$0xff]
      %v553 = vld [vmem:[%s546 + $0x30] sm:$0xff]
      %v554 = vld [vmem:[%s546 + $0x38] sm:$0xff]
      %555 = vmatpush.msra.mxu0 0.0
      %556 = vmatpush.msra.mxu0 0.0
      %557 = vmatpush.msra.mxu0 0.0
      %558 = vmatpush.msra.mxu0 0.0
      %559 = vmatpush.msra.mxu0 0.0
      %560 = vmatpush.msra.mxu0 0.0
      %561 = vmatpush.msra.mxu0 0.0
      %562 = vmatpush.msra.mxu0 0.0
      %563 = vmatpush.msra.mxu0 %v554
      %564 = vmatpush.msra.mxu0 %v553
      %565 = vmatpush.msra.mxu0 %v552
      %566 = vmatpush.msra.mxu0 %v551
      %567 = vmatpush.msra.mxu0 %v550
      %568 = vmatpush.msra.mxu0 %v549
      %569 = vmatpush.msra.mxu0 %v548
      %570 = vmatpush.msra.mxu0 %v547
      %571 = vmatmul.f32.gmra.mxu0 %v518
      %v572 = vpop.f32.mrf.mxu0
      %v573 = vadd.f32 0.0, %v572
      %574 = vmatmul.f32.gmra.mxu0 %v521
      %v575 = vpop.f32.mrf.mxu0
      %v576 = vadd.f32 0.0, %v575
      %577 = vdwg.mxu0
      %v578 = vmax.f32 %v541, %v573
      %v579 = vmax.f32 %v544, %v576
      %v580 = vld [vmem:[%s6] sm:$0x1]
      %v582 = vperm.slane %v580, 0
      %v584 = vadd.f32 %v578, %v582
      %v585 = vadd.f32 %v579, %v582
      %586 = vst [vmem:[#allocation3] sm:$0xff] %v584
      %587 = vst [vmem:[#allocation3 + $0x8] sm:$0xff] %v585
      %v588 = vld [vmem:[#allocation3] ss:$2 sm:$0xff]
      %s589 = scalar_lea.vmem [#allocation3], 1
      %v590 = vld [vmem:[%s589] ss:$2 sm:$0xff]
      %v591 = vmax.f32 %v588, %v590
      %592 = vst [vmem:[%s296] sm:$0xff] %v591
      %p593 = scmp.lt.s32.totalorder %s22, 1
      %s594 = scalar_select %p593, %s22, 1
      %p595 = scmp.lt.s32.totalorder %s23, 0
      %s596 = scalar_select %p595, %s23, 0
      %s597 = sadd.s32 %s596, %s594
      %s598 = smul.addr %s597, 8
      %s599 = scalar_lea.vmem %s7, %s598
      // Predicated region
      $region49: #{feature_branch_forward.2} parent=47 // pred_check
        %p600 = pneg %p202
      $region50: #{feature_branch_forward.2} parent=47 // pred_check_branch
        %602 = sbr.rel (%p600) target = $region52
      $region51: #{feature_branch_forward.2} parent=47 // pred_region
        _
      $region52: #{feature_branch_forward.2} parent=47 // pred_fallthru
        _
    $region48: #{feature_branch_forward.2} parent=5 // pred_fallthru
      _
    %p603 = scmp.le.s32.totalorder 2, %s13
    // Predicated region
    $region53: #{feature_branch_forward.2} parent=5 // pred_check
      %p604 = pneg %p603
    $region54: #{feature_branch_forward.2} parent=5 // pred_check_branch
      %606 = sbr.rel (%p604) target = $region56
    $region55: #{feature_branch_forward.2} parent=5 // pred_region
      %s607 = ssub.s32 %s13, 2
      // Predicated region
      $region57: #{feature_branch_forward.2} parent=55 // pred_check
        %p608 = pneg %p208
      $region58: #{feature_branch_forward.2} parent=55 // pred_check_branch
        %610 = sbr.rel (%p608) target = $region60
      $region59: #{feature_branch_forward.2} parent=55 // pred_region
        %p611 = scmp.lt.s32.totalorder %s24, 1
        %s612 = scalar_select %p611, %s24, 1
        %p613 = scmp.lt.s32.totalorder %s25, 0
        %s614 = scalar_select %p613, %s25, 0
        %s615 = sadd.s32 %s614, %s612
        %s616 = smul.addr %s615, 8
        %s617 = scalar_lea.vmem %s7, %s616
      $region60: #{feature_branch_forward.2} parent=55 // pred_fallthru
        _
    $region56: #{feature_branch_forward.2} parent=5 // pred_fallthru
      _
  $region6: #{feature_branch_forward.2} parent=0 // loop_footer
    %s17 = sadd.s32 1, %s13
  $region7: #{feature_branch_forward.2} parent=0 // loop_footer_branch
    %12 = sbr.rel target = $region3
  $region8: #{feature_branch_forward.2} parent=0 // loop_exit
    _

// kernel: feature_branch_forward.3
$region0: #{feature_branch_forward.3}
  #allocation0 [shape = 'u32[]', space=smem, size = 0x4, offset = 0x4, fixed_abs, tag = 'smem constant byte address 0x4 - core index']
  #allocation1 [shape = 'u32[72,128]{1,0:T(1,128)}', space=vmem, size = 0x9000, scoped, tag = 'internal scratch']
  #allocation2 [shape = 'f32[10,128]{1,0:T(8,128)}', space=vmem, size = 0x2000, scoped, tag = 'scratch operand']
  %s0 = inlined_call_operand.vmem [shape: f32[2,10,128], index: 0, kind: input, shape index: {}]
  %s1 = inlined_call_operand.vmem [shape: f32[128,128], index: 1, kind: input, shape index: {}]
  %s2 = inlined_call_operand.vmem [shape: f32[1,128], index: 2, kind: input, shape index: {}]
  %s3 = inlined_call_operand.vmem [shape: f32[3,128,128], index: 3, kind: input, shape index: {}]
  %s4 = inlined_call_operand.vmem [shape: f32[1,128], index: 4, kind: input, shape index: {}]
  %s5 = inlined_call_operand.vmem [shape: f32[1,128,32], index: 5, kind: input, shape index: {}]
  %s6 = inlined_call_operand.vmem [shape: f32[1,32], index: 6, kind: input, shape index: {}]
  %s7 = inlined_call_operand.vmem [shape: f32[2,8,32], index: 7, kind: output, shape index: {}]
  %s8 = sld [smem:[#allocation0]]
  $region61: #{feature_branch_forward.3} parent=0
    _
  %s10 = ssub.s32 1, %s8
  %s11 = scalar_select 0, %s10, %s8
  loop: start=0, step=1, limit=4
  $region2: #{feature_branch_forward.3} parent=0 // loop_pre_header
    _
  $region3: #{feature_branch_forward.3} parent=0 // loop_header
    %s13 = sphi 0, %s17
    %p14 = scmp.ge.s32.totalorder %s13, 4
    %s20 = sphi 0, %s32
    %s21 = sphi 0, %s28
    %s22 = sphi 0, %s20
    %s23 = sphi 0, %s21
    %s24 = sphi 0, %s22
    %s25 = sphi 0, %s23
    %s35 = sphi 0, %s37
    %s38 = sphi 0, %s35
    %s39 = sphi 0, %s38
    %s55 = sphi 0, %s39
    %s59 = sphi 0, %s59
    %s61 = sphi 0, %s59
    %s62 = sphi 0, %s61
    %s76 = sphi 0, %s62
    %s80 = sphi 0, %s80
    %s82 = sphi 0, %s80
    %s83 = sphi 0, %s82
    %s97 = sphi 0, %s83
    %s101 = sphi 0, %s101
    %s103 = sphi 0, %s101
    %s104 = sphi 0, %s103
    %s118 = sphi 0, %s104
    %s122 = sphi 0, %s122
    %s124 = sphi 0, %s122
    %s125 = sphi 0, %s124
    %s139 = sphi 0, %s125
    %s143 = sphi 0, %s143
    %s145 = sphi 0, %s143
    %s146 = sphi 0, %s145
    %s160 = sphi 0, %s146
    %s164 = sphi 0, %s164
    %s166 = sphi 0, %s164
    %s167 = sphi 0, %s166
    %s181 = sphi 0, %s167
    %s189 = sphi 0, %s191
    %s192 = sphi 0, %s189
    %s193 = sphi 0, %s192
    %s209 = sphi 0, %s193
  $region4: #{feature_branch_forward.3} parent=0 // loop_header_branch
    %16 = sbr.rel (%p14) target = $region8
  $region5: #{feature_branch_forward.3} parent=0 // loop_body
    %s18 = ssub.s32 %s13, 1
    %s19 = ssub.s32 %s13, 2
    %s26 = sadd.s32 1, %s21
    %p27 = scmp.ge.s32.totalorder %s26, 1
    %s28 = scalar_select %p27, 0, %s26
    %s29 = sadd.s32 1, %s20
    %s30 = scalar_select %p27, %s29, %s20
    %p31 = scmp.ge.s32.totalorder %s30, 2
    %s32 = scalar_select %p31, 0, %s30
    %s33 = ssub.s32 %s20, %s32
    %p34 = scmp.eq.s32.totalorder %s33, 0
    %s36 = sadd.s32 %s35, 1
    %s37 = scalar_select %p34, %s35, %s36
    %p40 = pneg %p34
    %p41 = scmp.eq.s32.totalorder %s13, 1
    %p42 = por %p40, %p41
    %p43 = scmp.ne.s32.totalorder %s35, %s38
    %p44 = scmp.eq.s32.totalorder %s13, 0
    %p45 = por %p43, %p44
    %p46 = scmp.ne.s32.totalorder %s35, %s38
    %p47 = scmp.eq.s32.totalorder %s18, 1
    %p48 = por %p46, %p47
    %p49 = scmp.ne.s32.totalorder %s38, %s39
    %p50 = scmp.eq.s32.totalorder %s18, 0
    %p51 = por %p49, %p50
    %p52 = scmp.ne.s32.totalorder %s38, %s39
    %p53 = scmp.eq.s32.totalorder %s19, 1
    %p54 = por %p52, %p53
    %p56 = scmp.ne.s32.totalorder %s39, %s55
    %p57 = scmp.eq.s32.totalorder %s19, 0
    %p58 = por %p56, %p57
    %s60 = sadd.s32 %s59, 1
    %p63 = scmp.eq.s32.totalorder %s13, 1
    %p64 = scmp.ne.s32.totalorder %s59, %s61
    %p65 = scmp.eq.s32.totalorder %s13, 0
    %p66 = por %p64, %p65
    %p67 = scmp.ne.s32.totalorder %s59, %s61
    %p68 = scmp.eq.s32.totalorder %s18, 1
    %p69 = por %p67, %p68
    %p70 = scmp.ne.s32.totalorder %s61, %s62
    %p71 = scmp.eq.s32.totalorder %s18, 0
    %p72 = por %p70, %p71
    %p73 = scmp.ne.s32.totalorder %s61, %s62
    %p74 = scmp.eq.s32.totalorder %s19, 1
    %p75 = por %p73, %p74
    %p77 = scmp.ne.s32.totalorder %s62, %s76
    %p78 = scmp.eq.s32.totalorder %s19, 0
    %p79 = por %p77, %p78
    %s81 = sadd.s32 %s80, 1
    %p84 = scmp.eq.s32.totalorder %s13, 1
    %p85 = scmp.ne.s32.totalorder %s80, %s82
    %p86 = scmp.eq.s32.totalorder %s13, 0
    %p87 = por %p85, %p86
    %p88 = scmp.ne.s32.totalorder %s80, %s82
    %p89 = scmp.eq.s32.totalorder %s18, 1
    %p90 = por %p88, %p89
    %p91 = scmp.ne.s32.totalorder %s82, %s83
    %p92 = scmp.eq.s32.totalorder %s18, 0
    %p93 = por %p91, %p92
    %p94 = scmp.ne.s32.totalorder %s82, %s83
    %p95 = scmp.eq.s32.totalorder %s19, 1
    %p96 = por %p94, %p95
    %p98 = scmp.ne.s32.totalorder %s83, %s97
    %p99 = scmp.eq.s32.totalorder %s19, 0
    %p100 = por %p98, %p99
    %s102 = sadd.s32 %s101, 1
    %p105 = scmp.eq.s32.totalorder %s13, 1
    %p106 = scmp.ne.s32.totalorder %s101, %s103
    %p107 = scmp.eq.s32.totalorder %s13, 0
    %p108 = por %p106, %p107
    %p109 = scmp.ne.s32.totalorder %s101, %s103
    %p110 = scmp.eq.s32.totalorder %s18, 1
    %p111 = por %p109, %p110
    %p112 = scmp.ne.s32.totalorder %s103, %s104
    %p113 = scmp.eq.s32.totalorder %s18, 0
    %p114 = por %p112, %p113
    %p115 = scmp.ne.s32.totalorder %s103, %s104
    %p116 = scmp.eq.s32.totalorder %s19, 1
    %p117 = por %p115, %p116
    %p119 = scmp.ne.s32.totalorder %s104, %s118
    %p120 = scmp.eq.s32.totalorder %s19, 0
    %p121 = por %p119, %p120
    %s123 = sadd.s32 %s122, 1
    %p126 = scmp.eq.s32.totalorder %s13, 1
    %p127 = scmp.ne.s32.totalorder %s122, %s124
    %p128 = scmp.eq.s32.totalorder %s13, 0
    %p129 = por %p127, %p128
    %p130 = scmp.ne.s32.totalorder %s122, %s124
    %p131 = scmp.eq.s32.totalorder %s18, 1
    %p132 = por %p130, %p131
    %p133 = scmp.ne.s32.totalorder %s124, %s125
    %p134 = scmp.eq.s32.totalorder %s18, 0
    %p135 = por %p133, %p134
    %p136 = scmp.ne.s32.totalorder %s124, %s125
    %p137 = scmp.eq.s32.totalorder %s19, 1
    %p138 = por %p136, %p137
    %p140 = scmp.ne.s32.totalorder %s125, %s139
    %p141 = scmp.eq.s32.totalorder %s19, 0
    %p142 = por %p140, %p141
    %s144 = sadd.s32 %s143, 1
    %p147 = scmp.eq.s32.totalorder %s13, 1
    %p148 = scmp.ne.s32.totalorder %s143, %s145
    %p149 = scmp.eq.s32.totalorder %s13, 0
    %p150 = por %p148, %p149
    %p151 = scmp.ne.s32.totalorder %s143, %s145
    %p152 = scmp.eq.s32.totalorder %s18, 1
    %p153 = por %p151, %p152
    %p154 = scmp.ne.s32.totalorder %s145, %s146
    %p155 = scmp.eq.s32.totalorder %s18, 0
    %p156 = por %p154, %p155
    %p157 = scmp.ne.s32.totalorder %s145, %s146
    %p158 = scmp.eq.s32.totalorder %s19, 1
    %p159 = por %p157, %p158
    %p161 = scmp.ne.s32.totalorder %s146, %s160
    %p162 = scmp.eq.s32.totalorder %s19, 0
    %p163 = por %p161, %p162
    %s165 = sadd.s32 %s164, 1
    %p168 = scmp.eq.s32.totalorder %s13, 1
    %p169 = scmp.ne.s32.totalorder %s164, %s166
    %p170 = scmp.eq.s32.totalorder %s13, 0
    %p171 = por %p169, %p170
    %p172 = scmp.ne.s32.totalorder %s164, %s166
    %p173 = scmp.eq.s32.totalorder %s18, 1
    %p174 = por %p172, %p173
    %p175 = scmp.ne.s32.totalorder %s166, %s167
    %p176 = scmp.eq.s32.totalorder %s18, 0
    %p177 = por %p175, %p176
    %p178 = scmp.ne.s32.totalorder %s166, %s167
    %p179 = scmp.eq.s32.totalorder %s19, 1
    %p180 = por %p178, %p179
    %p182 = scmp.ne.s32.totalorder %s167, %s181
    %p183 = scmp.eq.s32.totalorder %s19, 0
    %p184 = por %p182, %p183
    %s185 = ssub.s32 %s20, %s32
    %s186 = ssub.s32 %s21, %s28
    %s187 = sor.u32 %s185, %s186
    %p188 = scmp.eq.s32.totalorder %s187, 0
    %s190 = sadd.s32 %s189, 1
    %s191 = scalar_select %p188, %s189, %s190
    %p194 = pneg %p188
    %p195 = scmp.eq.s32.totalorder %s13, 1
    %p196 = por %p194, %p195
    %p197 = scmp.ne.s32.totalorder %s189, %s192
    %p198 = scmp.eq.s32.totalorder %s13, 0
    %p199 = por %p197, %p198
    %p200 = scmp.ne.s32.totalorder %s189, %s192
    %p201 = scmp.eq.s32.totalorder %s18, 1
    %p202 = por %p200, %p201
    %p203 = scmp.ne.s32.totalorder %s192, %s193
    %p204 = scmp.eq.s32.totalorder %s18, 0
    %p205 = por %p203, %p204
    %p206 = scmp.ne.s32.totalorder %s192, %s193
    %p207 = scmp.eq.s32.totalorder %s19, 1
    %p208 = por %p206, %p207
    %p210 = scmp.ne.s32.totalorder %s193, %s209
    %p211 = scmp.eq.s32.totalorder %s19, 0
    %p212 = por %p210, %p211
    %p213 = scmp.le.s32.totalorder 1, %s13
    %p214 = scmp.lt.s32.totalorder %s13, 3
    %p215 = pnand %p213, %p214
    %p216 = pneg %p215
    // Predicated region
    $region9: #{feature_branch_forward.3} parent=5 // pred_check
      _
    $region10: #{feature_branch_forward.3} parent=5 // pred_check_branch
      %218 = sbr.rel (%p215) target = $region12
    $region11: #{feature_branch_forward.3} parent=5 // pred_region
      %s219 = ssub.s32 %s13, 1
      // Predicated region
      $region13: #{feature_branch_forward.3} parent=11 // pred_check
        %p220 = pneg %p72
      $region14: #{feature_branch_forward.3} parent=11 // pred_check_branch
        %222 = sbr.rel (%p220) target = $region16
      $region15: #{feature_branch_forward.3} parent=11 // pred_region
        _
      $region16: #{feature_branch_forward.3} parent=11 // pred_fallthru
        _
      // Predicated region
      $region17: #{feature_branch_forward.3} parent=11 // pred_check
        %p223 = pneg %p93
      $region18: #{feature_branch_forward.3} parent=11 // pred_check_branch
        %225 = sbr.rel (%p223) target = $region20
      $region19: #{feature_branch_forward.3} parent=11 // pred_region
        _
      $region20: #{feature_branch_forward.3} parent=11 // pred_fallthru
        _
      // Predicated region
      $region21: #{feature_branch_forward.3} parent=11 // pred_check
        %p226 = pneg %p114
      $region22: #{feature_branch_forward.3} parent=11 // pred_check_branch
        %228 = sbr.rel (%p226) target = $region24
      $region23: #{feature_branch_forward.3} parent=11 // pred_region
        _
      $region24: #{feature_branch_forward.3} parent=11 // pred_fallthru
        _
      // Predicated region
      $region25: #{feature_branch_forward.3} parent=11 // pred_check
        %p229 = pneg %p135
      $region26: #{feature_branch_forward.3} parent=11 // pred_check_branch
        %231 = sbr.rel (%p229) target = $region28
      $region27: #{feature_branch_forward.3} parent=11 // pred_region
        _
      $region28: #{feature_branch_forward.3} parent=11 // pred_fallthru
        _
      // Predicated region
      $region29: #{feature_branch_forward.3} parent=11 // pred_check
        %p232 = pneg %p156
      $region30: #{feature_branch_forward.3} parent=11 // pred_check_branch
        %234 = sbr.rel (%p232) target = $region32
      $region31: #{feature_branch_forward.3} parent=11 // pred_region
        _
      $region32: #{feature_branch_forward.3} parent=11 // pred_fallthru
        _
      // Predicated region
      $region33: #{feature_branch_forward.3} parent=11 // pred_check
        %p235 = pneg %p177
      $region34: #{feature_branch_forward.3} parent=11 // pred_check_branch
        %237 = sbr.rel (%p235) target = $region36
      $region35: #{feature_branch_forward.3} parent=11 // pred_region
        _
      $region36: #{feature_branch_forward.3} parent=11 // pred_fallthru
        _
    $region12: #{feature_branch_forward.3} parent=5 // pred_fallthru
      _
    %p238 = scmp.lt.s32.totalorder %s13, 2
    // Predicated region
    $region37: #{feature_branch_forward.3} parent=5 // pred_check
      %p239 = pneg %p238
    $region38: #{feature_branch_forward.3} parent=5 // pred_check_branch
      %241 = sbr.rel (%p239) target = $region40
    $region39: #{feature_branch_forward.3} parent=5 // pred_region
      // Predicated region
      $region41: #{feature_branch_forward.3} parent=39 // pred_check
        %p242 = pneg %p45
      $region42: #{feature_branch_forward.3} parent=39 // pred_check_branch
        %244 = sbr.rel (%p242) target = $region44
      $region43: #{feature_branch_forward.3} parent=39 // pred_region
        %p245 = scmp.lt.s32.totalorder %s20, 1
        %s246 = scalar_select %p245, %s20, 1
        %s247 = smul.addr %s246, 2
        %s248 = smul.addr %s247, 8
        %s249 = scalar_lea.vmem %s0, %s248
      $region44: #{feature_branch_forward.3} parent=39 // pred_fallthru
        _
    $region40: #{feature_branch_forward.3} parent=5 // pred_fallthru
      _
    %p250 = scmp.le.s32.totalorder 1, %s13
    %p251 = scmp.lt.s32.totalorder %s13, 3
    %p252 = pnand %p250, %p251
    %p253 = pneg %p252
    // Predicated region
    $region45: #{feature_branch_forward.3} parent=5 // pred_check
      _
    $region46: #{feature_branch_forward.3} parent=5 // pred_check_branch
      %255 = sbr.rel (%p252) target = $region48
    $region47: #{feature_branch_forward.3} parent=5 // pred_region
      %s256 = ssub.s32 %s13, 1
      %p257 = scmp.lt.s32.totalorder %s22, 1
      %s258 = scalar_select %p257, %s22, 1
      %s259 = smul.addr %s258, 2
      %s260 = smul.addr %s259, 8
      %s261 = scalar_lea.vmem %s0, %s260
      %p262 = pneg %p51
      %p263 = pneg %p48
      %p264 = pneg %p72
      %p265 = pneg %p69
      %p266 = pneg %p93
      %p267 = pneg %p90
      %p268 = pneg %p114
      %p269 = pneg %p111
      %p270 = pneg %p135
      %p271 = pneg %p132
      %p272 = pneg %p156
      %p273 = pneg %p153
      %p274 = pneg %p177
      %p275 = pneg %p174
      %p276 = pneg %p205
      %p277 = pneg %p202
      %p278 = scmp.lt.s32.totalorder %s22, 1
      %s279 = scalar_select %p278, %s22, 1
      %p280 = scmp.lt.s32.totalorder %s23, 0
      %s281 = scalar_select %p280, %s23, 0
      %s282 = sadd.s32 %s281, %s279
      %s283 = smul.addr %s282, 8
      %s284 = scalar_lea.vmem %s7, %s283
      %p285 = scmp.lt.s32.totalorder %s22, 1
      %s286 = scalar_select %p285, %s22, 1
      %s287 = smul.addr %s286, 2
      %s288 = smul.addr %s287, 8
      %s289 = scalar_lea.vmem %s0, %s288
      %p290 = scmp.lt.s32.totalorder %s22, 1
      %s291 = scalar_select %p290, %s22, 1
      %p292 = scmp.lt.s32.totalorder %s23, 0
      %s293 = scalar_select %p292, %s23, 0
      %s294 = sadd.s32 %s293, %s291
      %s295 = smul.addr %s294, 8
      %s296 = scalar_lea.vmem %s7, %s295
      %s297 = smul.u32 %s23, 8
      %s298 = scalar_lea.vmem %s289, %s297
      %v299 = vld [vmem:[%s298] sm:$0xff]
      %v300 = vld [vmem:[%s298 + $0x8] sm:$0x3]
      %v301 = vld [vmem:[%s1] sm:$0xff]
      %v302 = vld [vmem:[%s1 + $0x8] sm:$0xff]
      %v303 = vld [vmem:[%s1 + $0x10] sm:$0xff]
      %v304 = vld [vmem:[%s1 + $0x18] sm:$0xff]
      %v305 = vld [vmem:[%s1 + $0x20] sm:$0xff]
      %v306 = vld [vmem:[%s1 + $0x28] sm:$0xff]
      %v307 = vld [vmem:[%s1 + $0x30] sm:$0xff]
      %v308 = vld [vmem:[%s1 + $0x38] sm:$0xff]
      %v309 = vld [vmem:[%s1 + $0x40] sm:$0xff]
      %v310 = vld [vmem:[%s1 + $0x48] sm:$0xff]
      %v311 = vld [vmem:[%s1 + $0x50] sm:$0xff]
      %v312 = vld [vmem:[%s1 + $0x58] sm:$0xff]
      %v313 = vld [vmem:[%s1 + $0x60] sm:$0xff]
      %v314 = vld [vmem:[%s1 + $0x68] sm:$0xff]
      %v315 = vld [vmem:[%s1 + $0x70] sm:$0xff]
      %v316 = vld [vmem:[%s1 + $0x78] sm:$0xff]
      %v317 = vld [vmem:[%s2] sm:$0x1]
      %v319 = vperm.slane %v317, 0
      %321 = vmatpush.msra.mxu0 %v316
      %322 = vmatpush.msra.mxu0 %v315
      %323 = vmatpush.msra.mxu0 %v314
      %324 = vmatpush.msra.mxu0 %v313
      %325 = vmatpush.msra.mxu0 %v312
      %326 = vmatpush.msra.mxu0 %v311
      %327 = vmatpush.msra.mxu0 %v310
      %328 = vmatpush.msra.mxu0 %v309
      %329 = vmatpush.msra.mxu0 %v308
      %330 = vmatpush.msra.mxu0 %v307
      %331 = vmatpush.msra.mxu0 %v306
      %332 = vmatpush.msra.mxu0 %v305
      %333 = vmatpush.msra.mxu0 %v304
      %334 = vmatpush.msra.mxu0 %v303
      %335 = vmatpush.msra.mxu0 %v302
      %336 = vmatpush.msra.mxu0 %v301
      %337 = vmatmul.f32.gmra.mxu0 %v299
      %v338 = vpop.f32.mrf.mxu0
      %v339 = vadd.f32 %v319, %v338
      %340 = vmatmul.f32.gmra.mxu0 %v300
      %v341 = vpop.f32.mrf.mxu0
      %v342 = vadd.f32 %v319, %v341
      %343 = vdwg.mxu0
      %v344 = vlaneseq
      %v345 = vshrl.u32 %v344, 7
      %v346 = vadd.s32 %v345, 8
      %v347 = vstv %s297
      %v348 = vadd.s32 %v345, %v347
      %v349 = vadd.s32 %v346, %v347
      %vm350 = vcmp.ge.s32.totalorder %v348, 1
      %vm351 = vcmp.ge.s32.totalorder %v349, 1
      %vm352 = vcmp.le.s32.totalorder %v348, 8
      %vm353 = vcmp.le.s32.totalorder %v349, 8
      %vm354 = vmand %vm350, %vm352
      %vm355 = vmand %vm351, %vm353
      %v356 = vsel %vm354, 1, 0
      %v357 = vsel %vm355, 1, 0
      %vm358 = vcmp.eq.s32.totalorder %v356, 1
      %vm359 = vcmp.eq.s32.totalorder %v357, 1
      %v360 = vsel %vm358, %v339, 0.0
      %v361 = vsel %vm359, %v342, 0.0
      %362 = vst [vmem:[#allocation2] sm:$0xff] %v360
      %363 = vst [vmem:[#allocation2 + $0x8] sm:$0x3] %v361
      %v364 = vld [vmem:[%s4] sm:$0x1]
      %v365 = vld [vmem:[#allocation2] sm:$0xff]
      %v366 = vld [vmem:[%s3] sm:$0xff]
      %v367 = vld [vmem:[%s3 + $0x8] sm:$0xff]
      %v368 = vld [vmem:[%s3 + $0x10] sm:$0xff]
      %v369 = vld [vmem:[%s3 + $0x18] sm:$0xff]
      %v370 = vld [vmem:[%s3 + $0x20] sm:$0xff]
      %v371 = vld [vmem:[%s3 + $0x28] sm:$0xff]
      %v372 = vld [vmem:[%s3 + $0x30] sm:$0xff]
      %v373 = vld [vmem:[%s3 + $0x38] sm:$0xff]
      %v374 = vld [vmem:[%s3 + $0x40] sm:$0xff]
      %v375 = vld [vmem:[%s3 + $0x48] sm:$0xff]
      %v376 = vld [vmem:[%s3 + $0x50] sm:$0xff]
      %v377 = vld [vmem:[%s3 + $0x58] sm:$0xff]
      %v378 = vld [vmem:[%s3 + $0x60] sm:$0xff]
      %v379 = vld [vmem:[%s3 + $0x68] sm:$0xff]
      %v380 = vld [vmem:[%s3 + $0x70] sm:$0xff]
      %v381 = vld [vmem:[%s3 + $0x78] sm:$0xff]
      %382 = vmatpush.msra.mxu0 %v381
      %383 = vmatpush.msra.mxu0 %v380
      %384 = vmatpush.msra.mxu0 %v379
      %385 = vmatpush.msra.mxu0 %v378
      %386 = vmatpush.msra.mxu0 %v377
      %387 = vmatpush.msra.mxu0 %v376
      %388 = vmatpush.msra.mxu0 %v375
      %389 = vmatpush.msra.mxu0 %v374
      %390 = vmatpush.msra.mxu0 %v373
      %391 = vmatpush.msra.mxu0 %v372
      %392 = vmatpush.msra.mxu0 %v371
      %393 = vmatpush.msra.mxu0 %v370
      %394 = vmatpush.msra.mxu0 %v369
      %395 = vmatpush.msra.mxu0 %v368
      %396 = vmatpush.msra.mxu0 %v367
      %397 = vmatpush.msra.mxu0 %v366
      %398 = vmatmul.f32.gmra.mxu0 %v365
      %v399 = vpop.f32.mrf.mxu0
      %v400 = vadd.f32 0.0, %v399
      %401 = vdwg.mxu0
      %v403 = vperm.slane %v364, 0
      %v405 = vadd.f32 %v403, %v400
      %v406 = vld [vmem:[#allocation2 + $0x1] sm:$0xff]
      %s407 = scalar_lea.vmem %s3, 128
      %v408 = vld [vmem:[%s407] sm:$0xff]
      %v409 = vld [vmem:[%s407 + $0x8] sm:$0xff]
      %v410 = vld [vmem:[%s407 + $0x10] sm:$0xff]
      %v411 = vld [vmem:[%s407 + $0x18] sm:$0xff]
      %v412 = vld [vmem:[%s407 + $0x20] sm:$0xff]
      %v413 = vld [vmem:[%s407 + $0x28] sm:$0xff]
      %v414 = vld [vmem:[%s407 + $0x30] sm:$0xff]
      %v415 = vld [vmem:[%s407 + $0x38] sm:$0xff]
      %v416 = vld [vmem:[%s407 + $0x40] sm:$0xff]
      %v417 = vld [vmem:[%s407 + $0x48] sm:$0xff]
      %v418 = vld [vmem:[%s407 + $0x50] sm:$0xff]
      %v419 = vld [vmem:[%s407 + $0x58] sm:$0xff]
      %v420 = vld [vmem:[%s407 + $0x60] sm:$0xff]
      %v421 = vld [vmem:[%s407 + $0x68] sm:$0xff]
      %v422 = vld [vmem:[%s407 + $0x70] sm:$0xff]
      %v423 = vld [vmem:[%s407 + $0x78] sm:$0xff]
      %424 = vmatpush.msra.mxu0 %v423
      %425 = vmatpush.msra.mxu0 %v422
      %426 = vmatpush.msra.mxu0 %v421
      %427 = vmatpush.msra.mxu0 %v420
      %428 = vmatpush.msra.mxu0 %v419
      %429 = vmatpush.msra.mxu0 %v418
      %430 = vmatpush.msra.mxu0 %v417
      %431 = vmatpush.msra.mxu0 %v416
      %432 = vmatpush.msra.mxu0 %v415
      %433 = vmatpush.msra.mxu0 %v414
      %434 = vmatpush.msra.mxu0 %v413
      %435 = vmatpush.msra.mxu0 %v412
      %436 = vmatpush.msra.mxu0 %v411
      %437 = vmatpush.msra.mxu0 %v410
      %438 = vmatpush.msra.mxu0 %v409
      %439 = vmatpush.msra.mxu0 %v408
      %440 = vmatmul.f32.gmra.mxu0 %v406
      %v441 = vpop.f32.mrf.mxu0
      %v442 = vadd.f32 0.0, %v441
      %443 = vdwg.mxu0
      %v444 = vadd.f32 %v405, %v442
      %v445 = vld [vmem:[#allocation2 + $0x2] sm:$0xff]
      %s446 = scalar_lea.vmem %s3, 256
      %v447 = vld [vmem:[%s446] sm:$0xff]
      %v448 = vld [vmem:[%s446 + $0x8] sm:$0xff]
      %v449 = vld [vmem:[%s446 + $0x10] sm:$0xff]
      %v450 = vld [vmem:[%s446 + $0x18] sm:$0xff]
      %v451 = vld [vmem:[%s446 + $0x20] sm:$0xff]
      %v452 = vld [vmem:[%s446 + $0x28] sm:$0xff]
      %v453 = vld [vmem:[%s446 + $0x30] sm:$0xff]
      %v454 = vld [vmem:[%s446 + $0x38] sm:$0xff]
      %v455 = vld [vmem:[%s446 + $0x40] sm:$0xff]
      %v456 = vld [vmem:[%s446 + $0x48] sm:$0xff]
      %v457 = vld [vmem:[%s446 + $0x50] sm:$0xff]
      %v458 = vld [vmem:[%s446 + $0x58] sm:$0xff]
      %v459 = vld [vmem:[%s446 + $0x60] sm:$0xff]
      %v460 = vld [vmem:[%s446 + $0x68] sm:$0xff]
      %v461 = vld [vmem:[%s446 + $0x70] sm:$0xff]
      %v462 = vld [vmem:[%s446 + $0x78] sm:$0xff]
      %463 = vmatpush.msra.mxu0 %v462
      %464 = vmatpush.msra.mxu0 %v461
      %465 = vmatpush.msra.mxu0 %v460
      %466 = vmatpush.msra.mxu0 %v459
      %467 = vmatpush.msra.mxu0 %v458
      %468 = vmatpush.msra.mxu0 %v457
      %469 = vmatpush.msra.mxu0 %v456
      %470 = vmatpush.msra.mxu0 %v455
      %471 = vmatpush.msra.mxu0 %v454
      %472 = vmatpush.msra.mxu0 %v453
      %473 = vmatpush.msra.mxu0 %v452
      %474 = vmatpush.msra.mxu0 %v451
      %475 = vmatpush.msra.mxu0 %v450
      %476 = vmatpush.msra.mxu0 %v449
      %477 = vmatpush.msra.mxu0 %v448
      %478 = vmatpush.msra.mxu0 %v447
      %479 = vmatmul.f32.gmra.mxu0 %v445
      %v480 = vpop.f32.mrf.mxu0
      %v481 = vadd.f32 0.0, %v480
      %482 = vdwg.mxu0
      %v483 = vadd.f32 %v444, %v481
      %v484 = vld [vmem:[%s5] sm:$0xff]
      %v485 = vld [vmem:[%s5 + $0x8] sm:$0xff]
      %v486 = vld [vmem:[%s5 + $0x10] sm:$0xff]
      %v487 = vld [vmem:[%s5 + $0x18] sm:$0xff]
      %v488 = vld [vmem:[%s5 + $0x20] sm:$0xff]
      %v489 = vld [vmem:[%s5 + $0x28] sm:$0xff]
      %v490 = vld [vmem:[%s5 + $0x30] sm:$0xff]
      %v491 = vld [vmem:[%s5 + $0x38] sm:$0xff]
      %v492 = vld [vmem:[%s5 + $0x40] sm:$0xff]
      %v493 = vld [vmem:[%s5 + $0x48] sm:$0xff]
      %v494 = vld [vmem:[%s5 + $0x50] sm:$0xff]
      %v495 = vld [vmem:[%s5 + $0x58] sm:$0xff]
      %v496 = vld [vmem:[%s5 + $0x60] sm:$0xff]
      %v497 = vld [vmem:[%s5 + $0x68] sm:$0xff]
      %v498 = vld [vmem:[%s5 + $0x70] sm:$0xff]
      %v499 = vld [vmem:[%s5 + $0x78] sm:$0xff]
      %v500 = vld [vmem:[%s6] sm:$0x1]
      %v502 = vperm.slane %v500, 0
      %504 = vmatpush.msra.mxu0 %v499
      %505 = vmatpush.msra.mxu0 %v498
      %506 = vmatpush.msra.mxu0 %v497
      %507 = vmatpush.msra.mxu0 %v496
      %508 = vmatpush.msra.mxu0 %v495
      %509 = vmatpush.msra.mxu0 %v494
      %510 = vmatpush.msra.mxu0 %v493
      %511 = vmatpush.msra.mxu0 %v492
      %512 = vmatpush.msra.mxu0 %v491
      %513 = vmatpush.msra.mxu0 %v490
      %514 = vmatpush.msra.mxu0 %v489
      %515 = vmatpush.msra.mxu0 %v488
      %516 = vmatpush.msra.mxu0 %v487
      %517 = vmatpush.msra.mxu0 %v486
      %518 = vmatpush.msra.mxu0 %v485
      %519 = vmatpush.msra.mxu0 %v484
      %520 = vmatmul.f32.gmra.mxu0 %v483
      %v521 = vpop.f32.mrf.mxu0
      %v522 = vadd.f32 %v502, %v521
      %523 = vdwg.mxu0
      %vm524 = vcmask 261120
      %525 = vst.msk [vmem:[%s296] sm:$0xff] %vm524, %v522
      %p526 = scmp.lt.s32.totalorder %s22, 1
      %s527 = scalar_select %p526, %s22, 1
      %p528 = scmp.lt.s32.totalorder %s23, 0
      %s529 = scalar_select %p528, %s23, 0
      %s530 = sadd.s32 %s529, %s527
      %s531 = smul.addr %s530, 8
      %s532 = scalar_lea.vmem %s7, %s531
      // Predicated region
      $region49: #{feature_branch_forward.3} parent=47 // pred_check
        %p533 = pneg %p202
      $region50: #{feature_branch_forward.3} parent=47 // pred_check_branch
        %535 = sbr.rel (%p533) target = $region52
      $region51: #{feature_branch_forward.3} parent=47 // pred_region
        _
      $region52: #{feature_branch_forward.3} parent=47 // pred_fallthru
        _
    $region48: #{feature_branch_forward.3} parent=5 // pred_fallthru
      _
    %p536 = scmp.le.s32.totalorder 2, %s13
    // Predicated region
    $region53: #{feature_branch_forward.3} parent=5 // pred_check
      %p537 = pneg %p536
    $region54: #{feature_branch_forward.3} parent=5 // pred_check_branch
      %539 = sbr.rel (%p537) target = $region56
    $region55: #{feature_branch_forward.3} parent=5 // pred_region
      %s540 = ssub.s32 %s13, 2
      // Predicated region
      $region57: #{feature_branch_forward.3} parent=55 // pred_check
        %p541 = pneg %p208
      $region58: #{feature_branch_forward.3} parent=55 // pred_check_branch
        %543 = sbr.rel (%p541) target = $region60
      $region59: #{feature_branch_forward.3} parent=55 // pred_region
        %p544 = scmp.lt.s32.totalorder %s24, 1
        %s545 = scalar_select %p544, %s24, 1
        %p546 = scmp.lt.s32.totalorder %s25, 0
        %s547 = scalar_select %p546, %s25, 0
        %s548 = sadd.s32 %s547, %s545
        %s549 = smul.addr %s548, 8
        %s550 = scalar_lea.vmem %s7, %s549
      $region60: #{feature_branch_forward.3} parent=55 // pred_fallthru
        _
    $region56: #{feature_branch_forward.3} parent=5 // pred_fallthru
      _
  $region6: #{feature_branch_forward.3} parent=0 // loop_footer
    %s17 = sadd.s32 1, %s13
  $region7: #{feature_branch_forward.3} parent=0 // loop_footer_branch
    %12 = sbr.rel target = $region3
  $region8: #{feature_branch_forward.3} parent=0 // loop_exit
    _

</llo_original>
